<compile_context>
chip_gen: v6e
topology: v6e:2x2x1
jax: 0.10.0
libtpu: 0.0.40
codegen_flags: <defaults>
</compile_context>

<pallas_src>
import functools

import jax
import jax.numpy as jnp
from jax.experimental import pallas as pl
from jax.experimental.pallas import tpu as pltpu

_LANE = 128


def _round_up(x, m):
    return ((x + m - 1) // m) * m


# ----------------------------- Pallas kernel ------------------------------- #

def _fused_gcn_kernel(a_ref, x_ref, w_ref, b_ref, o_ref, *, plan):
    """Whole ResidualGCN forward on VMEM-resident operands.

    a_ref : (NP, NP)    bf16  normalized adjacency (zero padded)
    x_ref : (NP, CP)    bf16  input node features (zero padded)
    w_ref : (L, CP, CP) bf16  stacked per-layer weights (zero padded)
    b_ref : (L, 1, CP)  f32   stacked per-layer biases (zero padded)
    o_ref : (NP, CP)    f32   output node features (padded)
    plan  : static tuple of (relu, save_residual, add_residual) per layer
    """
    num_layers = len(plan)
    h = x_ref[...]                      # bf16 running features (traced value)
    res = None                          # residual identity (traced value)
    for l, (relu, save_res, add_res) in enumerate(plan):
        if save_res:
            res = h
        # (NP, CP) @ (CP, CP) on the MXU: bf16 in, f32 accumulate.
        xw = jnp.dot(h, w_ref[l], preferred_element_type=jnp.float32)
        # (NP, NP) @ (NP, CP) on the MXU.
        out = jnp.dot(a_ref[...], xw.astype(jnp.bfloat16),
                      preferred_element_type=jnp.float32)
        out = out + b_ref[l]                       # f32 VPU epilogue
        if add_res:
            out = out + res.astype(jnp.float32)
        if relu:
            out = jnp.maximum(out, 0.0)
        if l == num_layers - 1:
            o_ref[...] = out.astype(o_ref.dtype)   # write epilogue directly
        else:
            h = out.astype(jnp.bfloat16)           # single cast per layer


def _full_spec(shape):
    ndim = len(shape)
    return pl.BlockSpec(shape, lambda i, _nd=ndim: (0,) * _nd)


# ------------------------- hoisted, one-time prep -------------------------- #

def gcn_norm_dense(edge_index, num_nodes):
    """Dense D^-1/2 (A + I) D^-1/2 matching PyG GCNConv's gcn_norm.

    Duplicate edges accumulate (scatter-add, like propagate); existing
    self-loops are dropped and replaced by a single unit self-loop per node
    (add_remaining_self_loops with unit edge weights).
    """
    src, dst = edge_index[0], edge_index[1]
    not_self = (src != dst).astype(jnp.float32)
    a = jnp.zeros((num_nodes, num_nodes), jnp.float32)
    a = a.at[dst, src].add(not_self)                       # A[target, source]
    a = a + jnp.eye(num_nodes, dtype=jnp.float32)          # unit self loops
    deg = a.sum(axis=1)
    dinv = jnp.where(deg > 0.0, 1.0 / jnp.sqrt(deg), 0.0)
    return dinv[:, None] * a * dinv[None, :]


def prepare_adjacency(edge_index, num_nodes):
    """Normalize + pad A_hat once per (static) graph; cached across forwards."""
    a_hat = gcn_norm_dense(edge_index, num_nodes)
    np_ = _round_up(num_nodes, _LANE)
    a_pad = jnp.pad(a_hat, ((0, np_ - num_nodes), (0, np_ - num_nodes)))
    return a_pad.astype(jnp.bfloat16)


def prepare_gcn_params(params):
    """Stack & pad all layer weights/biases once (hoisted out of forward)."""
    weights, biases, plan = [], [], []
    # x = relu(initial_conv(x)); dropout is identity in eval mode.
    weights.append(params["initial"]["w"]); biases.append(params["initial"]["b"])
    plan.append((True, False, False))
    # residual blocks: out = relu(conv2(relu(conv1(x))) + x)
    for blk in params["blocks"]:
        assert blk["conv1"]["w"].shape[0] == blk["conv2"]["w"].shape[1], (
            "projection blocks (in_channels != out_channels) not supported")
        weights.append(blk["conv1"]["w"]); biases.append(blk["conv1"]["b"])
        plan.append((True, True, False))          # relu, save identity
        weights.append(blk["conv2"]["w"]); biases.append(blk["conv2"]["b"])
        plan.append((True, False, True))          # relu(out + identity)
    # final conv, no activation.
    weights.append(params["final"]["w"]); biases.append(params["final"]["b"])
    plan.append((False, False, False))

    c_in = weights[0].shape[0]
    c_out = weights[-1].shape[1]
    cp = _round_up(max([c_in] + [w.shape[1] for w in weights]), _LANE)

    w_stack = jnp.stack([
        jnp.pad(w, ((0, cp - w.shape[0]), (0, cp - w.shape[1])))
        for w in weights]).astype(jnp.bfloat16)
    b_stack = jnp.stack([
        jnp.pad(b, (0, cp - b.shape[0]))[None, :] for b in biases
    ]).astype(jnp.float32)

    return {"w_stack": w_stack, "b_stack": b_stack, "plan": tuple(plan),
            "c_in": c_in, "c_out": c_out, "cp": cp}


# ------------------------------- forward pass ------------------------------ #

def residual_gcn_forward(prep, a_pad, x):
    """ResidualGCN.forward (eval mode) — single fused pallas_call."""
    n, c_in = x.shape
    np_ = a_pad.shape[0]
    cp = prep["cp"]
    x_pad = jnp.pad(x, ((0, np_ - n), (0, cp - c_in))).astype(jnp.bfloat16)

    kernel = functools.partial(_fused_gcn_kernel, plan=prep["plan"])
    out_pad = pl.pallas_call(
        kernel,
        out_shape=jax.ShapeDtypeStruct((np_, cp), jnp.float32),
        grid=(1,),
        in_specs=[_full_spec((np_, np_)), _full_spec((np_, cp)),
                  _full_spec(prep["w_stack"].shape),
                  _full_spec(prep["b_stack"].shape)],
        out_specs=_full_spec((np_, cp)),
        # No vmem_limit_bytes: all-resident footprint is < 1 MiB here, far
        # under the default scoped limit on every generation.
        compiler_params=pltpu.CompilerParams(
            dimension_semantics=("arbitrary",)),
    )(a_pad, x_pad, prep["w_stack"], prep["b_stack"])
    return out_pad[:n, :prep["c_out"]]


# ----------------------------- reference / init ----------------------------- #

def init_params(key, in_channels, hidden_channels, out_channels, num_layers=3):
    """Deterministic synthetic parameters (glorot-ish weights, zero biases)."""
    def glorot(k, fan_in, fan_out):
        scale = jnp.sqrt(6.0 / (fan_in + fan_out))
        return jax.random.uniform(k, (fan_in, fan_out), jnp.float32,
                                  minval=-scale, maxval=scale)

    keys = jax.random.split(key, 2 + 2 * (num_layers - 1))
    params = {
        "initial": {"w": glorot(keys[0], in_channels, hidden_channels),
                    "b": jnp.zeros((hidden_channels,), jnp.float32)},
        "final": {"w": glorot(keys[1], hidden_channels, out_channels),
                  "b": jnp.zeros((out_channels,), jnp.float32)},
        "blocks": [],
    }
    for i in range(num_layers - 1):
        params["blocks"].append({
            "conv1": {"w": glorot(keys[2 + 2 * i], hidden_channels, hidden_channels),
                      "b": jnp.zeros((hidden_channels,), jnp.float32)},
            "conv2": {"w": glorot(keys[3 + 2 * i], hidden_channels, hidden_channels),
                      "b": jnp.zeros((hidden_channels,), jnp.float32)},
            # projection is None: in_channels == out_channels (hidden).
        })
    return params


def residual_gcn_reference(params, x, edge_index):
    """Pure-JAX f32 reference for correctness checking."""
    a_hat = gcn_norm_dense(edge_index, x.shape[0])

    def conv(h, w, b):
        return a_hat @ (h @ w) + b

    h = jax.nn.relu(conv(x, params["initial"]["w"], params["initial"]["b"]))
    for blk in params["blocks"]:
        identity = h
        h = jax.nn.relu(conv(h, blk["conv1"]["w"], blk["conv1"]["b"]))
        h = jax.nn.relu(conv(h, blk["conv2"]["w"], blk["conv2"]["b"]) + identity)
    return conv(h, params["final"]["w"], params["final"]["b"])


# ---------------------------------- main ------------------------------------ #

if __name__ == "__main__":
    key = jax.random.PRNGKey(0)
    k_x, k_e, k_p = jax.random.split(key, 3)

    num_nodes = 64
    num_edges = 200
    in_channels, hidden_channels, out_channels = 16, 32, 8

    x = jax.random.normal(k_x, (num_nodes, in_channels), jnp.float32)
    edge_index = jax.random.randint(k_e, (2, num_edges), 0, num_nodes,
                                    dtype=jnp.int32)

    params = init_params(k_p, in_channels, hidden_channels, out_channels,
                         num_layers=3)

    # One-time, hoisted preparation (weight stacking + A_hat normalization /
    # padding) — cached across forwards for a static graph.
    prep = prepare_gcn_params(params)
    a_pad = prepare_adjacency(edge_index, num_nodes)

    fwd = jax.jit(functools.partial(residual_gcn_forward, prep, a_pad))
    out = fwd(x)
    jax.block_until_ready(out)

    assert out.shape == (num_nodes, out_channels)
    assert jnp.all(jnp.isfinite(out))

    ref = residual_gcn_reference(params, x, edge_index)
    assert jnp.allclose(out, ref, rtol=5e-2, atol=5e-2), (
        f"max abs diff {float(jnp.max(jnp.abs(out - ref)))}")

    print("KERNEL_OK")
</pallas_src>

<mosaic_0001>
module attributes {stable_mosaic.version = 11 : i64} {
  func.func @_fused_gcn_kernel(%arg0: i32, %arg1: memref<128x128xbf16, #tpu.memory_space<vmem>>, %arg2: memref<128x128xbf16, #tpu.memory_space<vmem>>, %arg3: memref<6x128x128xbf16, #tpu.memory_space<vmem>>, %arg4: memref<6x1x128xf32, #tpu.memory_space<vmem>>, %arg5: memref<128x128xf32, #tpu.memory_space<vmem>>) attributes {dimension_semantics = [#tpu.dimension_semantics<arbitrary>], iteration_bounds = array<i64: 1>, scalar_prefetch = 0 : i64, scratch_operands = 0 : i64, tpu.core_type = #tpu.core_type<tc>, window_params = [{pipeline_mode = #tpu.pipeline_mode<synchronous>, transform_indices = @transform_0, window_bounds = array<i64: 128, 128>}, {pipeline_mode = #tpu.pipeline_mode<synchronous>, transform_indices = @transform_1, window_bounds = array<i64: 128, 128>}, {pipeline_mode = #tpu.pipeline_mode<synchronous>, transform_indices = @transform_2, window_bounds = array<i64: 6, 128, 128>}, {pipeline_mode = #tpu.pipeline_mode<synchronous>, transform_indices = @transform_3, window_bounds = array<i64: 6, 1, 128>}, {pipeline_mode = #tpu.pipeline_mode<synchronous>, transform_indices = @transform_4, window_bounds = array<i64: 128, 128>}]} {
    %c0 = arith.constant 0 : index
    %c0_0 = arith.constant 0 : index
    %0 = vector.load %arg2[%c0, %c0_0] : memref<128x128xbf16, #tpu.memory_space<vmem>>, vector<128x128xbf16>
    %c0_1 = arith.constant 0 : index
    %c0_2 = arith.constant 0 : index
    %c0_3 = arith.constant 0 : index
    %1 = vector.load %arg3[%c0_1, %c0_2, %c0_3] : memref<6x128x128xbf16, #tpu.memory_space<vmem>>, vector<1x128x128xbf16>
    %2 = vector.shape_cast %1 : vector<1x128x128xbf16> to vector<128x128xbf16>
    %cst = arith.constant dense<0.000000e+00> : vector<128x128xf32>
    %3 = tpu.matmul %0, %2, %cst {dimension_numbers = #tpu.dot_dimension_numbers<[1], [0], [0], [1], [0, 0, 1, 1], [], []>} : vector<128x128xbf16>, vector<128x128xbf16>, vector<128x128xf32> -> vector<128x128xf32>
    %c0_4 = arith.constant 0 : index
    %c0_5 = arith.constant 0 : index
    %4 = vector.load %arg1[%c0_4, %c0_5] : memref<128x128xbf16, #tpu.memory_space<vmem>>, vector<128x128xbf16>
    %5 = arith.truncf %3 : vector<128x128xf32> to vector<128x128xbf16>
    %cst_6 = arith.constant dense<0.000000e+00> : vector<128x128xf32>
    %6 = tpu.matmul %4, %5, %cst_6 {dimension_numbers = #tpu.dot_dimension_numbers<[1], [0], [0], [1], [0, 0, 1, 1], [], []>} : vector<128x128xbf16>, vector<128x128xbf16>, vector<128x128xf32> -> vector<128x128xf32>
    %c0_7 = arith.constant 0 : index
    %c0_8 = arith.constant 0 : index
    %c0_9 = arith.constant 0 : index
    %7 = vector.load %arg4[%c0_7, %c0_8, %c0_9] : memref<6x1x128xf32, #tpu.memory_space<vmem>>, vector<1x1x128xf32>
    %8 = vector.shape_cast %7 : vector<1x1x128xf32> to vector<1x128xf32>
    %9 = vector.broadcast %8 : vector<1x128xf32> to vector<128x128xf32>
    %10 = arith.addf %6, %9 : vector<128x128xf32>
    %cst_10 = arith.constant 0.000000e+00 : f32
    %11 = vector.broadcast %cst_10 : f32 to vector<128x128xf32>
    %12 = arith.maximumf %10, %11 : vector<128x128xf32>
    %13 = arith.truncf %12 : vector<128x128xf32> to vector<128x128xbf16>
    %c1 = arith.constant 1 : index
    %c0_11 = arith.constant 0 : index
    %c0_12 = arith.constant 0 : index
    %14 = vector.load %arg3[%c1, %c0_11, %c0_12] : memref<6x128x128xbf16, #tpu.memory_space<vmem>>, vector<1x128x128xbf16>
    %15 = vector.shape_cast %14 : vector<1x128x128xbf16> to vector<128x128xbf16>
    %cst_13 = arith.constant dense<0.000000e+00> : vector<128x128xf32>
    %16 = tpu.matmul %13, %15, %cst_13 {dimension_numbers = #tpu.dot_dimension_numbers<[1], [0], [0], [1], [0, 0, 1, 1], [], []>} : vector<128x128xbf16>, vector<128x128xbf16>, vector<128x128xf32> -> vector<128x128xf32>
    %c0_14 = arith.constant 0 : index
    %c0_15 = arith.constant 0 : index
    %17 = vector.load %arg1[%c0_14, %c0_15] : memref<128x128xbf16, #tpu.memory_space<vmem>>, vector<128x128xbf16>
    %18 = arith.truncf %16 : vector<128x128xf32> to vector<128x128xbf16>
    %cst_16 = arith.constant dense<0.000000e+00> : vector<128x128xf32>
    %19 = tpu.matmul %17, %18, %cst_16 {dimension_numbers = #tpu.dot_dimension_numbers<[1], [0], [0], [1], [0, 0, 1, 1], [], []>} : vector<128x128xbf16>, vector<128x128xbf16>, vector<128x128xf32> -> vector<128x128xf32>
    %c1_17 = arith.constant 1 : index
    %c0_18 = arith.constant 0 : index
    %c0_19 = arith.constant 0 : index
    %20 = vector.load %arg4[%c1_17, %c0_18, %c0_19] : memref<6x1x128xf32, #tpu.memory_space<vmem>>, vector<1x1x128xf32>
    %21 = vector.shape_cast %20 : vector<1x1x128xf32> to vector<1x128xf32>
    %22 = vector.broadcast %21 : vector<1x128xf32> to vector<128x128xf32>
    %23 = arith.addf %19, %22 : vector<128x128xf32>
    %cst_20 = arith.constant 0.000000e+00 : f32
    %24 = vector.broadcast %cst_20 : f32 to vector<128x128xf32>
    %25 = arith.maximumf %23, %24 : vector<128x128xf32>
    %26 = arith.truncf %25 : vector<128x128xf32> to vector<128x128xbf16>
    %c2 = arith.constant 2 : index
    %c0_21 = arith.constant 0 : index
    %c0_22 = arith.constant 0 : index
    %27 = vector.load %arg3[%c2, %c0_21, %c0_22] : memref<6x128x128xbf16, #tpu.memory_space<vmem>>, vector<1x128x128xbf16>
    %28 = vector.shape_cast %27 : vector<1x128x128xbf16> to vector<128x128xbf16>
    %cst_23 = arith.constant dense<0.000000e+00> : vector<128x128xf32>
    %29 = tpu.matmul %26, %28, %cst_23 {dimension_numbers = #tpu.dot_dimension_numbers<[1], [0], [0], [1], [0, 0, 1, 1], [], []>} : vector<128x128xbf16>, vector<128x128xbf16>, vector<128x128xf32> -> vector<128x128xf32>
    %c0_24 = arith.constant 0 : index
    %c0_25 = arith.constant 0 : index
    %30 = vector.load %arg1[%c0_24, %c0_25] : memref<128x128xbf16, #tpu.memory_space<vmem>>, vector<128x128xbf16>
    %31 = arith.truncf %29 : vector<128x128xf32> to vector<128x128xbf16>
    %cst_26 = arith.constant dense<0.000000e+00> : vector<128x128xf32>
    %32 = tpu.matmul %30, %31, %cst_26 {dimension_numbers = #tpu.dot_dimension_numbers<[1], [0], [0], [1], [0, 0, 1, 1], [], []>} : vector<128x128xbf16>, vector<128x128xbf16>, vector<128x128xf32> -> vector<128x128xf32>
    %c2_27 = arith.constant 2 : index
    %c0_28 = arith.constant 0 : index
    %c0_29 = arith.constant 0 : index
    %33 = vector.load %arg4[%c2_27, %c0_28, %c0_29] : memref<6x1x128xf32, #tpu.memory_space<vmem>>, vector<1x1x128xf32>
    %34 = vector.shape_cast %33 : vector<1x1x128xf32> to vector<1x128xf32>
    %35 = vector.broadcast %34 : vector<1x128xf32> to vector<128x128xf32>
    %36 = arith.addf %32, %35 : vector<128x128xf32>
    %37 = arith.extf %13 : vector<128x128xbf16> to vector<128x128xf32>
    %38 = arith.addf %36, %37 : vector<128x128xf32>
    %cst_30 = arith.constant 0.000000e+00 : f32
    %39 = vector.broadcast %cst_30 : f32 to vector<128x128xf32>
    %40 = arith.maximumf %38, %39 : vector<128x128xf32>
    %41 = arith.truncf %40 : vector<128x128xf32> to vector<128x128xbf16>
    %c3 = arith.constant 3 : index
    %c0_31 = arith.constant 0 : index
    %c0_32 = arith.constant 0 : index
    %42 = vector.load %arg3[%c3, %c0_31, %c0_32] : memref<6x128x128xbf16, #tpu.memory_space<vmem>>, vector<1x128x128xbf16>
    %43 = vector.shape_cast %42 : vector<1x128x128xbf16> to vector<128x128xbf16>
    %cst_33 = arith.constant dense<0.000000e+00> : vector<128x128xf32>
    %44 = tpu.matmul %41, %43, %cst_33 {dimension_numbers = #tpu.dot_dimension_numbers<[1], [0], [0], [1], [0, 0, 1, 1], [], []>} : vector<128x128xbf16>, vector<128x128xbf16>, vector<128x128xf32> -> vector<128x128xf32>
    %c0_34 = arith.constant 0 : index
    %c0_35 = arith.constant 0 : index
    %45 = vector.load %arg1[%c0_34, %c0_35] : memref<128x128xbf16, #tpu.memory_space<vmem>>, vector<128x128xbf16>
    %46 = arith.truncf %44 : vector<128x128xf32> to vector<128x128xbf16>
    %cst_36 = arith.constant dense<0.000000e+00> : vector<128x128xf32>
    %47 = tpu.matmul %45, %46, %cst_36 {dimension_numbers = #tpu.dot_dimension_numbers<[1], [0], [0], [1], [0, 0, 1, 1], [], []>} : vector<128x128xbf16>, vector<128x128xbf16>, vector<128x128xf32> -> vector<128x128xf32>
    %c3_37 = arith.constant 3 : index
    %c0_38 = arith.constant 0 : index
    %c0_39 = arith.constant 0 : index
    %48 = vector.load %arg4[%c3_37, %c0_38, %c0_39] : memref<6x1x128xf32, #tpu.memory_space<vmem>>, vector<1x1x128xf32>
    %49 = vector.shape_cast %48 : vector<1x1x128xf32> to vector<1x128xf32>
    %50 = vector.broadcast %49 : vector<1x128xf32> to vector<128x128xf32>
    %51 = arith.addf %47, %50 : vector<128x128xf32>
    %cst_40 = arith.constant 0.000000e+00 : f32
    %52 = vector.broadcast %cst_40 : f32 to vector<128x128xf32>
    %53 = arith.maximumf %51, %52 : vector<128x128xf32>
    %54 = arith.truncf %53 : vector<128x128xf32> to vector<128x128xbf16>
    %c4 = arith.constant 4 : index
    %c0_41 = arith.constant 0 : index
    %c0_42 = arith.constant 0 : index
    %55 = vector.load %arg3[%c4, %c0_41, %c0_42] : memref<6x128x128xbf16, #tpu.memory_space<vmem>>, vector<1x128x128xbf16>
    %56 = vector.shape_cast %55 : vector<1x128x128xbf16> to vector<128x128xbf16>
    %cst_43 = arith.constant dense<0.000000e+00> : vector<128x128xf32>
    %57 = tpu.matmul %54, %56, %cst_43 {dimension_numbers = #tpu.dot_dimension_numbers<[1], [0], [0], [1], [0, 0, 1, 1], [], []>} : vector<128x128xbf16>, vector<128x128xbf16>, vector<128x128xf32> -> vector<128x128xf32>
    %c0_44 = arith.constant 0 : index
    %c0_45 = arith.constant 0 : index
    %58 = vector.load %arg1[%c0_44, %c0_45] : memref<128x128xbf16, #tpu.memory_space<vmem>>, vector<128x128xbf16>
    %59 = arith.truncf %57 : vector<128x128xf32> to vector<128x128xbf16>
    %cst_46 = arith.constant dense<0.000000e+00> : vector<128x128xf32>
    %60 = tpu.matmul %58, %59, %cst_46 {dimension_numbers = #tpu.dot_dimension_numbers<[1], [0], [0], [1], [0, 0, 1, 1], [], []>} : vector<128x128xbf16>, vector<128x128xbf16>, vector<128x128xf32> -> vector<128x128xf32>
    %c4_47 = arith.constant 4 : index
    %c0_48 = arith.constant 0 : index
    %c0_49 = arith.constant 0 : index
    %61 = vector.load %arg4[%c4_47, %c0_48, %c0_49] : memref<6x1x128xf32, #tpu.memory_space<vmem>>, vector<1x1x128xf32>
    %62 = vector.shape_cast %61 : vector<1x1x128xf32> to vector<1x128xf32>
    %63 = vector.broadcast %62 : vector<1x128xf32> to vector<128x128xf32>
    %64 = arith.addf %60, %63 : vector<128x128xf32>
    %65 = arith.extf %41 : vector<128x128xbf16> to vector<128x128xf32>
    %66 = arith.addf %64, %65 : vector<128x128xf32>
    %cst_50 = arith.constant 0.000000e+00 : f32
    %67 = vector.broadcast %cst_50 : f32 to vector<128x128xf32>
    %68 = arith.maximumf %66, %67 : vector<128x128xf32>
    %69 = arith.truncf %68 : vector<128x128xf32> to vector<128x128xbf16>
    %c5 = arith.constant 5 : index
    %c0_51 = arith.constant 0 : index
    %c0_52 = arith.constant 0 : index
    %70 = vector.load %arg3[%c5, %c0_51, %c0_52] : memref<6x128x128xbf16, #tpu.memory_space<vmem>>, vector<1x128x128xbf16>
    %71 = vector.shape_cast %70 : vector<1x128x128xbf16> to vector<128x128xbf16>
    %cst_53 = arith.constant dense<0.000000e+00> : vector<128x128xf32>
    %72 = tpu.matmul %69, %71, %cst_53 {dimension_numbers = #tpu.dot_dimension_numbers<[1], [0], [0], [1], [0, 0, 1, 1], [], []>} : vector<128x128xbf16>, vector<128x128xbf16>, vector<128x128xf32> -> vector<128x128xf32>
    %c0_54 = arith.constant 0 : index
    %c0_55 = arith.constant 0 : index
    %73 = vector.load %arg1[%c0_54, %c0_55] : memref<128x128xbf16, #tpu.memory_space<vmem>>, vector<128x128xbf16>
    %74 = arith.truncf %72 : vector<128x128xf32> to vector<128x128xbf16>
    %cst_56 = arith.constant dense<0.000000e+00> : vector<128x128xf32>
    %75 = tpu.matmul %73, %74, %cst_56 {dimension_numbers = #tpu.dot_dimension_numbers<[1], [0], [0], [1], [0, 0, 1, 1], [], []>} : vector<128x128xbf16>, vector<128x128xbf16>, vector<128x128xf32> -> vector<128x128xf32>
    %c5_57 = arith.constant 5 : index
    %c0_58 = arith.constant 0 : index
    %c0_59 = arith.constant 0 : index
    %76 = vector.load %arg4[%c5_57, %c0_58, %c0_59] : memref<6x1x128xf32, #tpu.memory_space<vmem>>, vector<1x1x128xf32>
    %77 = vector.shape_cast %76 : vector<1x1x128xf32> to vector<1x128xf32>
    %78 = vector.broadcast %77 : vector<1x128xf32> to vector<128x128xf32>
    %79 = arith.addf %75, %78 : vector<128x128xf32>
    %c0_60 = arith.constant 0 : index
    %c0_61 = arith.constant 0 : index
    %80 = vector.load %arg5[%c0_60, %c0_61] : memref<128x128xf32, #tpu.memory_space<vmem>>, vector<128x128xf32>
    tpu.vector_store %arg5[%c0_60, %c0_61], %79 {strides = array<i32>} : memref<128x128xf32, #tpu.memory_space<vmem>>, vector<128x128xf32>,
    return
  }
  func.func @transform_0(%arg0: i32) -> (i32, i32) {
    %c0_i32 = arith.constant 0 : i32
    %c0_i32_0 = arith.constant 0 : i32
    %c0_i32_1 = arith.constant 0 : i32
    return %c0_i32, %c0_i32_0 : i32, i32
  }
  func.func @transform_1(%arg0: i32) -> (i32, i32) {
    %c0_i32 = arith.constant 0 : i32
    %c0_i32_0 = arith.constant 0 : i32
    %c0_i32_1 = arith.constant 0 : i32
    return %c0_i32, %c0_i32_0 : i32, i32
  }
  func.func @transform_2(%arg0: i32) -> (i32, i32, i32) {
    %c0_i32 = arith.constant 0 : i32
    %c0_i32_0 = arith.constant 0 : i32
    %c0_i32_1 = arith.constant 0 : i32
    %c0_i32_2 = arith.constant 0 : i32
    return %c0_i32, %c0_i32_0, %c0_i32_1 : i32, i32, i32
  }
  func.func @transform_3(%arg0: i32) -> (i32, i32, i32) {
    %c0_i32 = arith.constant 0 : i32
    %c0_i32_0 = arith.constant 0 : i32
    %c0_i32_1 = arith.constant 0 : i32
    %c0_i32_2 = arith.constant 0 : i32
    return %c0_i32, %c0_i32_0, %c0_i32_1 : i32, i32, i32
  }
  func.func @transform_4(%arg0: i32) -> (i32, i32) {
    %c0_i32 = arith.constant 0 : i32
    %c0_i32_0 = arith.constant 0 : i32
    %c0_i32_1 = arith.constant 0 : i32
    return %c0_i32, %c0_i32_0 : i32, i32
  }
}

</mosaic_0001>

<llo_original>
// kernel: residual_gcn_forward.1
$region0: #{residual_gcn_forward.1}
  #allocation0 [shape = 'u32[]', space=smem, size = 0x4, offset = 0x4, fixed_abs, tag = 'smem constant byte address 0x4 - core index']
  #allocation1 [shape = 'u32[144,128]{1,0:T(1,128)}', space=vmem, size = 0x12000, scoped, tag = 'internal scratch']
  %s0 = inlined_call_operand.vmem [shape: bf16[128,128], index: 0, kind: input, shape index: {}]
  %s1 = inlined_call_operand.vmem [shape: bf16[128,128], index: 1, kind: input, shape index: {}]
  %s2 = inlined_call_operand.hbm [shape: bf16[6,128,128], index: 2, kind: input, shape index: {}]
  %s3 = inlined_call_operand.vmem [shape: f32[6,1,128], index: 3, kind: input, shape index: {}]
  %s4 = inlined_call_operand.vmem [shape: f32[128,128], index: 4, kind: output, shape index: {}]
  %s5 = sld [smem:[#allocation0]]
  $region30: #{residual_gcn_forward.1} parent=0
    _
  %s7 = ssub.s32 1, %s5
  %s8 = scalar_select 0, %s7, %s5
  $region1: #{residual_gcn_forward.1} parent=0
    #allocation2 [shape = 'u8[196608]{0}', space=vmem, size = 0x30000, scoped, tag = 'input window, operand 2, single buffered']
    #allocation3 [shape = 's32[1]{0}', space=sflag, size = 0x4, scoped, tag = 'scoped memory for residual_gcn_forward.1']
    %9 = vsyncpa [#allocation3], 0
    // Predicated region
    $region2: #{residual_gcn_forward.1} parent=1 // pred_check
      _
    $region3: #{residual_gcn_forward.1} parent=1 // pred_check_branch
      %11 = sbr.rel (0) target = $region5
    $region4: #{residual_gcn_forward.1} parent=1 // pred_region
      _
    $region5: #{residual_gcn_forward.1} parent=1 // pred_fallthru
      _
    // Predicated region
    $region6: #{residual_gcn_forward.1} parent=1 // pred_check
      _
    $region7: #{residual_gcn_forward.1} parent=1 // pred_check_branch
      %13 = sbr.rel (0) target = $region9
    $region8: #{residual_gcn_forward.1} parent=1 // pred_region
      _
    $region9: #{residual_gcn_forward.1} parent=1 // pred_fallthru
      _
    // Predicated region
    $region10: #{residual_gcn_forward.1} parent=1 // pred_check
      _
    $region11: #{residual_gcn_forward.1} parent=1 // pred_check_branch
      %15 = sbr.rel (0) target = $region13
    $region12: #{residual_gcn_forward.1} parent=1 // pred_region
      %s17 = ssub.s32 6144, 6144
      %18 = vsyncadd [#allocation3], %s17
      %s19 = sshll.u32 [#allocation2], 4
      %s20 = int_to_ptr.vmem [resolvable:$true] %s19
      %25 = dma.hbm_to_vmem [thread:$0]  %s2, 6144, %s20, [#allocation3], 64, 64, 4
    $region13: #{residual_gcn_forward.1} parent=1 // pred_fallthru
      _
    // Predicated region
    $region14: #{residual_gcn_forward.1} parent=1 // pred_check
      _
    $region15: #{residual_gcn_forward.1} parent=1 // pred_check_branch
      %27 = sbr.rel (0) target = $region17
    $region16: #{residual_gcn_forward.1} parent=1 // pred_region
      _
    $region17: #{residual_gcn_forward.1} parent=1 // pred_fallthru
      _
    // Predicated region
    $region18: #{residual_gcn_forward.1} parent=1 // pred_check
      _
    $region19: #{residual_gcn_forward.1} parent=1 // pred_check_branch
      %29 = sbr.rel (0) target = $region21
    $region20: #{residual_gcn_forward.1} parent=1 // pred_region
      %30 = dma.done [#allocation3], 6144
    $region21: #{residual_gcn_forward.1} parent=1 // pred_fallthru
      _
    %v32 = vld [vmem:[%s1] sm:$0xf]
    %v33 = vld [vmem:[%s1 + $0x4] sm:$0xf]
    %v34 = vld [vmem:[%s1 + $0x8] sm:$0xf]
    %v35 = vld [vmem:[%s1 + $0xc] sm:$0xf]
    %v36 = vld [vmem:[%s1 + $0x10] sm:$0xf]
    %v37 = vld [vmem:[%s1 + $0x14] sm:$0xf]
    %v38 = vld [vmem:[%s1 + $0x18] sm:$0xf]
    %v39 = vld [vmem:[%s1 + $0x1c] sm:$0xf]
    %v40 = vld [vmem:[%s1 + $0x20] sm:$0xf]
    %v41 = vld [vmem:[%s1 + $0x24] sm:$0xf]
    %v42 = vld [vmem:[%s1 + $0x28] sm:$0xf]
    %v43 = vld [vmem:[%s1 + $0x2c] sm:$0xf]
    %v44 = vld [vmem:[%s1 + $0x30] sm:$0xf]
    %v45 = vld [vmem:[%s1 + $0x34] sm:$0xf]
    %v46 = vld [vmem:[%s1 + $0x38] sm:$0xf]
    %v47 = vld [vmem:[%s1 + $0x3c] sm:$0xf]
    %v48 = vld [vmem:[#allocation2] sm:$0xf]
    %v49 = vld [vmem:[#allocation2 + $0x4] sm:$0xf]
    %v50 = vld [vmem:[#allocation2 + $0x8] sm:$0xf]
    %v51 = vld [vmem:[#allocation2 + $0xc] sm:$0xf]
    %v52 = vld [vmem:[#allocation2 + $0x10] sm:$0xf]
    %v53 = vld [vmem:[#allocation2 + $0x14] sm:$0xf]
    %v54 = vld [vmem:[#allocation2 + $0x18] sm:$0xf]
    %v55 = vld [vmem:[#allocation2 + $0x1c] sm:$0xf]
    %v56 = vld [vmem:[#allocation2 + $0x20] sm:$0xf]
    %v57 = vld [vmem:[#allocation2 + $0x24] sm:$0xf]
    %v58 = vld [vmem:[#allocation2 + $0x28] sm:$0xf]
    %v59 = vld [vmem:[#allocation2 + $0x2c] sm:$0xf]
    %v60 = vld [vmem:[#allocation2 + $0x30] sm:$0xf]
    %v61 = vld [vmem:[#allocation2 + $0x34] sm:$0xf]
    %v62 = vld [vmem:[#allocation2 + $0x38] sm:$0xf]
    %v63 = vld [vmem:[#allocation2 + $0x3c] sm:$0xf]
    %v80 = vunpack.c.l.b16 %v32
    %v81 = vunpack.c.l.b16 %v33
    %v82 = vunpack.c.l.b16 %v34
    %v83 = vunpack.c.l.b16 %v35
    %v84 = vunpack.c.l.b16 %v36
    %v85 = vunpack.c.l.b16 %v37
    %v86 = vunpack.c.l.b16 %v38
    %v87 = vunpack.c.l.b16 %v39
    %v88 = vunpack.c.l.b16 %v40
    %v89 = vunpack.c.l.b16 %v41
    %v90 = vunpack.c.l.b16 %v42
    %v91 = vunpack.c.l.b16 %v43
    %v92 = vunpack.c.l.b16 %v44
    %v93 = vunpack.c.l.b16 %v45
    %v94 = vunpack.c.l.b16 %v46
    %v95 = vunpack.c.l.b16 %v47
    %v96 = vpack.c.b16 %v81, %v80
    %v97 = vpack.c.b16 %v83, %v82
    %v98 = vpack.c.b16 %v85, %v84
    %v99 = vpack.c.b16 %v87, %v86
    %v100 = vpack.c.b16 %v89, %v88
    %v101 = vpack.c.b16 %v91, %v90
    %v102 = vpack.c.b16 %v93, %v92
    %v103 = vpack.c.b16 %v95, %v94
    %v128 = vunpack.c.l.b16 %v48
    %v129 = vunpack.c.l.b16 %v49
    %v130 = vunpack.c.l.b16 %v50
    %v131 = vunpack.c.l.b16 %v51
    %v132 = vunpack.c.l.b16 %v52
    %v133 = vunpack.c.l.b16 %v53
    %v134 = vunpack.c.l.b16 %v54
    %v135 = vunpack.c.l.b16 %v55
    %v136 = vunpack.c.l.b16 %v56
    %v137 = vunpack.c.l.b16 %v57
    %v138 = vunpack.c.l.b16 %v58
    %v139 = vunpack.c.l.b16 %v59
    %v140 = vunpack.c.l.b16 %v60
    %v141 = vunpack.c.l.b16 %v61
    %v142 = vunpack.c.l.b16 %v62
    %v143 = vunpack.c.l.b16 %v63
    %v144 = vpack.c.b16 %v129, %v128
    %v145 = vpack.c.b16 %v131, %v130
    %v146 = vpack.c.b16 %v133, %v132
    %v147 = vpack.c.b16 %v135, %v134
    %v148 = vpack.c.b16 %v137, %v136
    %v149 = vpack.c.b16 %v139, %v138
    %v150 = vpack.c.b16 %v141, %v140
    %v151 = vpack.c.b16 %v143, %v142
    %160 = vmatprep.subr.bf16.mxu0 0
    %161 = vmatpush1.bf16.msra.mxu0 %v151
    %162 = vmatprep.subr.bf16.mxu0 0
    %163 = vmatpush1.bf16.msra.mxu0 %v150
    %164 = vmatprep.subr.bf16.mxu0 0
    %165 = vmatpush1.bf16.msra.mxu0 %v149
    %166 = vmatprep.subr.bf16.mxu0 0
    %167 = vmatpush1.bf16.msra.mxu0 %v148
    %168 = vmatprep.subr.bf16.mxu0 0
    %169 = vmatpush1.bf16.msra.mxu0 %v147
    %170 = vmatprep.subr.bf16.mxu0 0
    %171 = vmatpush1.bf16.msra.mxu0 %v146
    %172 = vmatprep.subr.bf16.mxu0 0
    %173 = vmatpush1.bf16.msra.mxu0 %v145
    %174 = vmatprep.subr.bf16.mxu0 0
    %175 = vmatpush1.bf16.msra.mxu0 %v144
    %176 = vmatprep.subr.bf16.mxu0 0
    %177 = vmatpush2.bf16.msra.mxu0 0
    %178 = vmatprep.subr.bf16.mxu0 0
    %179 = vmatpush2.bf16.msra.mxu0 0
    %180 = vmatprep.subr.bf16.mxu0 0
    %181 = vmatpush2.bf16.msra.mxu0 0
    %182 = vmatprep.subr.bf16.mxu0 0
    %183 = vmatpush2.bf16.msra.mxu0 0
    %184 = vmatprep.subr.bf16.mxu0 0
    %185 = vmatpush2.bf16.msra.mxu0 0
    %186 = vmatprep.subr.bf16.mxu0 0
    %187 = vmatpush2.bf16.msra.mxu0 0
    %188 = vmatprep.subr.bf16.mxu0 0
    %189 = vmatpush2.bf16.msra.mxu0 0
    %190 = vmatprep.subr.bf16.mxu0 0
    %191 = vmatpush2.bf16.msra.mxu0 0
    %192 = vmatprep.mubr.bf16.mxu0 0
    %193 = vmatmul.mubr.bf16.gmra.mxu0 %v96
    %v194 = vpop.f32.mrf.mxu0
    %v195 = vadd.f32 0.0, %v194
    %v196 = vpop.f32.mrf.mxu0
    %v197 = vpop.f32.mrf.mxu0
    %v198 = vadd.f32 0.0, %v197
    %v199 = vpop.f32.mrf.mxu0
    %200 = vmatprep.mubr.bf16.mxu0 0
    %201 = vmatmul.mubr.bf16.gmra.mxu0 %v97
    %v202 = vpop.f32.mrf.mxu0
    %v203 = vadd.f32 0.0, %v202
    %v204 = vpop.f32.mrf.mxu0
    %v205 = vpop.f32.mrf.mxu0
    %v206 = vadd.f32 0.0, %v205
    %v207 = vpop.f32.mrf.mxu0
    %208 = vmatprep.mubr.bf16.mxu0 0
    %209 = vmatmul.mubr.bf16.gmra.mxu0 %v98
    %v210 = vpop.f32.mrf.mxu0
    %v211 = vadd.f32 0.0, %v210
    %v212 = vpop.f32.mrf.mxu0
    %v213 = vpop.f32.mrf.mxu0
    %v214 = vadd.f32 0.0, %v213
    %v215 = vpop.f32.mrf.mxu0
    %216 = vmatprep.mubr.bf16.mxu0 0
    %217 = vmatmul.mubr.bf16.gmra.mxu0 %v99
    %v218 = vpop.f32.mrf.mxu0
    %v219 = vadd.f32 0.0, %v218
    %v220 = vpop.f32.mrf.mxu0
    %v221 = vpop.f32.mrf.mxu0
    %v222 = vadd.f32 0.0, %v221
    %v223 = vpop.f32.mrf.mxu0
    %224 = vmatprep.mubr.bf16.mxu0 0
    %225 = vmatmul.mubr.bf16.gmra.mxu0 %v100
    %v226 = vpop.f32.mrf.mxu0
    %v227 = vadd.f32 0.0, %v226
    %v228 = vpop.f32.mrf.mxu0
    %v229 = vpop.f32.mrf.mxu0
    %v230 = vadd.f32 0.0, %v229
    %v231 = vpop.f32.mrf.mxu0
    %232 = vmatprep.mubr.bf16.mxu0 0
    %233 = vmatmul.mubr.bf16.gmra.mxu0 %v101
    %v234 = vpop.f32.mrf.mxu0
    %v235 = vadd.f32 0.0, %v234
    %v236 = vpop.f32.mrf.mxu0
    %v237 = vpop.f32.mrf.mxu0
    %v238 = vadd.f32 0.0, %v237
    %v239 = vpop.f32.mrf.mxu0
    %240 = vmatprep.mubr.bf16.mxu0 0
    %241 = vmatmul.mubr.bf16.gmra.mxu0 %v102
    %v242 = vpop.f32.mrf.mxu0
    %v243 = vadd.f32 0.0, %v242
    %v244 = vpop.f32.mrf.mxu0
    %v245 = vpop.f32.mrf.mxu0
    %v246 = vadd.f32 0.0, %v245
    %v247 = vpop.f32.mrf.mxu0
    %248 = vmatprep.mubr.bf16.mxu0 0
    %249 = vmatmul.mubr.bf16.gmra.mxu0 %v103
    %v250 = vpop.f32.mrf.mxu0
    %v251 = vadd.f32 0.0, %v250
    %v252 = vpop.f32.mrf.mxu0
    %v253 = vpop.f32.mrf.mxu0
    %v254 = vadd.f32 0.0, %v253
    %v255 = vpop.f32.mrf.mxu0
    %256 = vdwg.mxu0
    %v257 = vld [vmem:[%s0] sm:$0xf]
    %v258 = vld [vmem:[%s0 + $0x4] sm:$0xf]
    %v259 = vld [vmem:[%s0 + $0x8] sm:$0xf]
    %v260 = vld [vmem:[%s0 + $0xc] sm:$0xf]
    %v261 = vld [vmem:[%s0 + $0x10] sm:$0xf]
    %v262 = vld [vmem:[%s0 + $0x14] sm:$0xf]
    %v263 = vld [vmem:[%s0 + $0x18] sm:$0xf]
    %v264 = vld [vmem:[%s0 + $0x1c] sm:$0xf]
    %v265 = vld [vmem:[%s0 + $0x20] sm:$0xf]
    %v266 = vld [vmem:[%s0 + $0x24] sm:$0xf]
    %v267 = vld [vmem:[%s0 + $0x28] sm:$0xf]
    %v268 = vld [vmem:[%s0 + $0x2c] sm:$0xf]
    %v269 = vld [vmem:[%s0 + $0x30] sm:$0xf]
    %v270 = vld [vmem:[%s0 + $0x34] sm:$0xf]
    %v271 = vld [vmem:[%s0 + $0x38] sm:$0xf]
    %v272 = vld [vmem:[%s0 + $0x3c] sm:$0xf]
    %v273 = vpack.c.bf16 %v198, %v195
    %v274 = vpack.c.bf16 %v206, %v203
    %v275 = vpack.c.bf16 %v214, %v211
    %v276 = vpack.c.bf16 %v222, %v219
    %v277 = vpack.c.bf16 %v230, %v227
    %v278 = vpack.c.bf16 %v238, %v235
    %v279 = vpack.c.bf16 %v246, %v243
    %v280 = vpack.c.bf16 %v254, %v251
    %v281 = vld [vmem:[%s3] sm:$0x1]
    %v283 = vlaneseq
    %v284 = vshrl.u32 %v283, 7
    %v285 = vsub.s32 0, %v284
    %v286 = vrot.slane %v281, %v285
    %v304 = vunpack.c.l.b16 %v257
    %v305 = vunpack.c.l.b16 %v258
    %v306 = vunpack.c.l.b16 %v259
    %v307 = vunpack.c.l.b16 %v260
    %v308 = vunpack.c.l.b16 %v261
    %v309 = vunpack.c.l.b16 %v262
    %v310 = vunpack.c.l.b16 %v263
    %v311 = vunpack.c.l.b16 %v264
    %v312 = vunpack.c.l.b16 %v265
    %v313 = vunpack.c.l.b16 %v266
    %v314 = vunpack.c.l.b16 %v267
    %v315 = vunpack.c.l.b16 %v268
    %v316 = vunpack.c.l.b16 %v269
    %v317 = vunpack.c.l.b16 %v270
    %v318 = vunpack.c.l.b16 %v271
    %v319 = vunpack.c.l.b16 %v272
    %v320 = vpack.c.b16 %v305, %v304
    %v321 = vpack.c.b16 %v307, %v306
    %v322 = vpack.c.b16 %v309, %v308
    %v323 = vpack.c.b16 %v311, %v310
    %v324 = vpack.c.b16 %v313, %v312
    %v325 = vpack.c.b16 %v315, %v314
    %v326 = vpack.c.b16 %v317, %v316
    %v327 = vpack.c.b16 %v319, %v318
    %336 = vmatprep.subr.bf16.mxu0 0
    %337 = vmatpush1.bf16.msra.mxu0 %v280
    %338 = vmatprep.subr.bf16.mxu0 0
    %339 = vmatpush1.bf16.msra.mxu0 %v279
    %340 = vmatprep.subr.bf16.mxu0 0
    %341 = vmatpush1.bf16.msra.mxu0 %v278
    %342 = vmatprep.subr.bf16.mxu0 0
    %343 = vmatpush1.bf16.msra.mxu0 %v277
    %344 = vmatprep.subr.bf16.mxu0 0
    %345 = vmatpush1.bf16.msra.mxu0 %v276
    %346 = vmatprep.subr.bf16.mxu0 0
    %347 = vmatpush1.bf16.msra.mxu0 %v275
    %348 = vmatprep.subr.bf16.mxu0 0
    %349 = vmatpush1.bf16.msra.mxu0 %v274
    %350 = vmatprep.subr.bf16.mxu0 0
    %351 = vmatpush1.bf16.msra.mxu0 %v273
    %352 = vmatprep.subr.bf16.mxu0 0
    %353 = vmatpush2.bf16.msra.mxu0 0
    %354 = vmatprep.subr.bf16.mxu0 0
    %355 = vmatpush2.bf16.msra.mxu0 0
    %356 = vmatprep.subr.bf16.mxu0 0
    %357 = vmatpush2.bf16.msra.mxu0 0
    %358 = vmatprep.subr.bf16.mxu0 0
    %359 = vmatpush2.bf16.msra.mxu0 0
    %360 = vmatprep.subr.bf16.mxu0 0
    %361 = vmatpush2.bf16.msra.mxu0 0
    %362 = vmatprep.subr.bf16.mxu0 0
    %363 = vmatpush2.bf16.msra.mxu0 0
    %364 = vmatprep.subr.bf16.mxu0 0
    %365 = vmatpush2.bf16.msra.mxu0 0
    %366 = vmatprep.subr.bf16.mxu0 0
    %367 = vmatpush2.bf16.msra.mxu0 0
    %368 = vmatprep.mubr.bf16.mxu0 0
    %369 = vmatmul.mubr.bf16.gmra.mxu0 %v320
    %v370 = vpop.f32.mrf.mxu0
    %v371 = vadd.f32 %v286, %v370
    %v372 = vpop.f32.mrf.mxu0
    %v373 = vpop.f32.mrf.mxu0
    %v374 = vadd.f32 %v286, %v373
    %v375 = vpop.f32.mrf.mxu0
    %376 = vmatprep.mubr.bf16.mxu0 0
    %377 = vmatmul.mubr.bf16.gmra.mxu0 %v321
    %v378 = vpop.f32.mrf.mxu0
    %v379 = vadd.f32 %v286, %v378
    %v380 = vpop.f32.mrf.mxu0
    %v381 = vpop.f32.mrf.mxu0
    %v382 = vadd.f32 %v286, %v381
    %v383 = vpop.f32.mrf.mxu0
    %384 = vmatprep.mubr.bf16.mxu0 0
    %385 = vmatmul.mubr.bf16.gmra.mxu0 %v322
    %v386 = vpop.f32.mrf.mxu0
    %v387 = vadd.f32 %v286, %v386
    %v388 = vpop.f32.mrf.mxu0
    %v389 = vpop.f32.mrf.mxu0
    %v390 = vadd.f32 %v286, %v389
    %v391 = vpop.f32.mrf.mxu0
    %392 = vmatprep.mubr.bf16.mxu0 0
    %393 = vmatmul.mubr.bf16.gmra.mxu0 %v323
    %v394 = vpop.f32.mrf.mxu0
    %v395 = vadd.f32 %v286, %v394
    %v396 = vpop.f32.mrf.mxu0
    %v397 = vpop.f32.mrf.mxu0
    %v398 = vadd.f32 %v286, %v397
    %v399 = vpop.f32.mrf.mxu0
    %400 = vmatprep.mubr.bf16.mxu0 0
    %401 = vmatmul.mubr.bf16.gmra.mxu0 %v324
    %v402 = vpop.f32.mrf.mxu0
    %v403 = vadd.f32 %v286, %v402
    %v404 = vpop.f32.mrf.mxu0
    %v405 = vpop.f32.mrf.mxu0
    %v406 = vadd.f32 %v286, %v405
    %v407 = vpop.f32.mrf.mxu0
    %408 = vmatprep.mubr.bf16.mxu0 0
    %409 = vmatmul.mubr.bf16.gmra.mxu0 %v325
    %v410 = vpop.f32.mrf.mxu0
    %v411 = vadd.f32 %v286, %v410
    %v412 = vpop.f32.mrf.mxu0
    %v413 = vpop.f32.mrf.mxu0
    %v414 = vadd.f32 %v286, %v413
    %v415 = vpop.f32.mrf.mxu0
    %416 = vmatprep.mubr.bf16.mxu0 0
    %417 = vmatmul.mubr.bf16.gmra.mxu0 %v326
    %v418 = vpop.f32.mrf.mxu0
    %v419 = vadd.f32 %v286, %v418
    %v420 = vpop.f32.mrf.mxu0
    %v421 = vpop.f32.mrf.mxu0
    %v422 = vadd.f32 %v286, %v421
    %v423 = vpop.f32.mrf.mxu0
    %424 = vmatprep.mubr.bf16.mxu0 0
    %425 = vmatmul.mubr.bf16.gmra.mxu0 %v327
    %v426 = vpop.f32.mrf.mxu0
    %v427 = vadd.f32 %v286, %v426
    %v428 = vpop.f32.mrf.mxu0
    %v429 = vpop.f32.mrf.mxu0
    %v430 = vadd.f32 %v286, %v429
    %v431 = vpop.f32.mrf.mxu0
    %432 = vdwg.mxu0
    %v433 = vmax.f32 %v371, 0.0
    %v434 = vmax.f32 %v374, 0.0
    %v435 = vmax.f32 %v379, 0.0
    %v436 = vmax.f32 %v382, 0.0
    %v437 = vmax.f32 %v387, 0.0
    %v438 = vmax.f32 %v390, 0.0
    %v439 = vmax.f32 %v395, 0.0
    %v440 = vmax.f32 %v398, 0.0
    %v441 = vmax.f32 %v403, 0.0
    %v442 = vmax.f32 %v406, 0.0
    %v443 = vmax.f32 %v411, 0.0
    %v444 = vmax.f32 %v414, 0.0
    %v445 = vmax.f32 %v419, 0.0
    %v446 = vmax.f32 %v422, 0.0
    %v447 = vmax.f32 %v427, 0.0
    %v448 = vmax.f32 %v430, 0.0
    %v449 = vpack.c.bf16 %v434, %v433
    %v450 = vpack.c.bf16 %v436, %v435
    %v451 = vpack.c.bf16 %v438, %v437
    %v452 = vpack.c.bf16 %v440, %v439
    %v453 = vpack.c.bf16 %v442, %v441
    %v454 = vpack.c.bf16 %v444, %v443
    %v455 = vpack.c.bf16 %v446, %v445
    %v456 = vpack.c.bf16 %v448, %v447
    %s457 = scalar_lea.vmem [#allocation2], 64
    %v458 = vld [vmem:[%s457] sm:$0xf]
    %v459 = vld [vmem:[%s457 + $0x4] sm:$0xf]
    %v460 = vld [vmem:[%s457 + $0x8] sm:$0xf]
    %v461 = vld [vmem:[%s457 + $0xc] sm:$0xf]
    %v462 = vld [vmem:[%s457 + $0x10] sm:$0xf]
    %v463 = vld [vmem:[%s457 + $0x14] sm:$0xf]
    %v464 = vld [vmem:[%s457 + $0x18] sm:$0xf]
    %v465 = vld [vmem:[%s457 + $0x1c] sm:$0xf]
    %v466 = vld [vmem:[%s457 + $0x20] sm:$0xf]
    %v467 = vld [vmem:[%s457 + $0x24] sm:$0xf]
    %v468 = vld [vmem:[%s457 + $0x28] sm:$0xf]
    %v469 = vld [vmem:[%s457 + $0x2c] sm:$0xf]
    %v470 = vld [vmem:[%s457 + $0x30] sm:$0xf]
    %v471 = vld [vmem:[%s457 + $0x34] sm:$0xf]
    %v472 = vld [vmem:[%s457 + $0x38] sm:$0xf]
    %v473 = vld [vmem:[%s457 + $0x3c] sm:$0xf]
    %v490 = vunpack.c.l.b16 %v458
    %v491 = vunpack.c.l.b16 %v459
    %v492 = vunpack.c.l.b16 %v460
    %v493 = vunpack.c.l.b16 %v461
    %v494 = vunpack.c.l.b16 %v462
    %v495 = vunpack.c.l.b16 %v463
    %v496 = vunpack.c.l.b16 %v464
    %v497 = vunpack.c.l.b16 %v465
    %v498 = vunpack.c.l.b16 %v466
    %v499 = vunpack.c.l.b16 %v467
    %v500 = vunpack.c.l.b16 %v468
    %v501 = vunpack.c.l.b16 %v469
    %v502 = vunpack.c.l.b16 %v470
    %v503 = vunpack.c.l.b16 %v471
    %v504 = vunpack.c.l.b16 %v472
    %v505 = vunpack.c.l.b16 %v473
    %v506 = vpack.c.b16 %v491, %v490
    %v507 = vpack.c.b16 %v493, %v492
    %v508 = vpack.c.b16 %v495, %v494
    %v509 = vpack.c.b16 %v497, %v496
    %v510 = vpack.c.b16 %v499, %v498
    %v511 = vpack.c.b16 %v501, %v500
    %v512 = vpack.c.b16 %v503, %v502
    %v513 = vpack.c.b16 %v505, %v504
    %522 = vmatprep.subr.bf16.mxu0 0
    %523 = vmatpush1.bf16.msra.mxu0 %v513
    %524 = vmatprep.subr.bf16.mxu0 0
    %525 = vmatpush1.bf16.msra.mxu0 %v512
    %526 = vmatprep.subr.bf16.mxu0 0
    %527 = vmatpush1.bf16.msra.mxu0 %v511
    %528 = vmatprep.subr.bf16.mxu0 0
    %529 = vmatpush1.bf16.msra.mxu0 %v510
    %530 = vmatprep.subr.bf16.mxu0 0
    %531 = vmatpush1.bf16.msra.mxu0 %v509
    %532 = vmatprep.subr.bf16.mxu0 0
    %533 = vmatpush1.bf16.msra.mxu0 %v508
    %534 = vmatprep.subr.bf16.mxu0 0
    %535 = vmatpush1.bf16.msra.mxu0 %v507
    %536 = vmatprep.subr.bf16.mxu0 0
    %537 = vmatpush1.bf16.msra.mxu0 %v506
    %538 = vmatprep.subr.bf16.mxu0 0
    %539 = vmatpush2.bf16.msra.mxu0 0
    %540 = vmatprep.subr.bf16.mxu0 0
    %541 = vmatpush2.bf16.msra.mxu0 0
    %542 = vmatprep.subr.bf16.mxu0 0
    %543 = vmatpush2.bf16.msra.mxu0 0
    %544 = vmatprep.subr.bf16.mxu0 0
    %545 = vmatpush2.bf16.msra.mxu0 0
    %546 = vmatprep.subr.bf16.mxu0 0
    %547 = vmatpush2.bf16.msra.mxu0 0
    %548 = vmatprep.subr.bf16.mxu0 0
    %549 = vmatpush2.bf16.msra.mxu0 0
    %550 = vmatprep.subr.bf16.mxu0 0
    %551 = vmatpush2.bf16.msra.mxu0 0
    %552 = vmatprep.subr.bf16.mxu0 0
    %553 = vmatpush2.bf16.msra.mxu0 0
    %554 = vmatprep.mubr.bf16.mxu0 0
    %555 = vmatmul.mubr.bf16.gmra.mxu0 %v449
    %v556 = vpop.f32.mrf.mxu0
    %v557 = vadd.f32 0.0, %v556
    %v558 = vpop.f32.mrf.mxu0
    %v559 = vpop.f32.mrf.mxu0
    %v560 = vadd.f32 0.0, %v559
    %v561 = vpop.f32.mrf.mxu0
    %562 = vmatprep.mubr.bf16.mxu0 0
    %563 = vmatmul.mubr.bf16.gmra.mxu0 %v450
    %v564 = vpop.f32.mrf.mxu0
    %v565 = vadd.f32 0.0, %v564
    %v566 = vpop.f32.mrf.mxu0
    %v567 = vpop.f32.mrf.mxu0
    %v568 = vadd.f32 0.0, %v567
    %v569 = vpop.f32.mrf.mxu0
    %570 = vmatprep.mubr.bf16.mxu0 0
    %571 = vmatmul.mubr.bf16.gmra.mxu0 %v451
    %v572 = vpop.f32.mrf.mxu0
    %v573 = vadd.f32 0.0, %v572
    %v574 = vpop.f32.mrf.mxu0
    %v575 = vpop.f32.mrf.mxu0
    %v576 = vadd.f32 0.0, %v575
    %v577 = vpop.f32.mrf.mxu0
    %578 = vmatprep.mubr.bf16.mxu0 0
    %579 = vmatmul.mubr.bf16.gmra.mxu0 %v452
    %v580 = vpop.f32.mrf.mxu0
    %v581 = vadd.f32 0.0, %v580
    %v582 = vpop.f32.mrf.mxu0
    %v583 = vpop.f32.mrf.mxu0
    %v584 = vadd.f32 0.0, %v583
    %v585 = vpop.f32.mrf.mxu0
    %586 = vmatprep.mubr.bf16.mxu0 0
    %587 = vmatmul.mubr.bf16.gmra.mxu0 %v453
    %v588 = vpop.f32.mrf.mxu0
    %v589 = vadd.f32 0.0, %v588
    %v590 = vpop.f32.mrf.mxu0
    %v591 = vpop.f32.mrf.mxu0
    %v592 = vadd.f32 0.0, %v591
    %v593 = vpop.f32.mrf.mxu0
    %594 = vmatprep.mubr.bf16.mxu0 0
    %595 = vmatmul.mubr.bf16.gmra.mxu0 %v454
    %v596 = vpop.f32.mrf.mxu0
    %v597 = vadd.f32 0.0, %v596
    %v598 = vpop.f32.mrf.mxu0
    %v599 = vpop.f32.mrf.mxu0
    %v600 = vadd.f32 0.0, %v599
    %v601 = vpop.f32.mrf.mxu0
    %602 = vmatprep.mubr.bf16.mxu0 0
    %603 = vmatmul.mubr.bf16.gmra.mxu0 %v455
    %v604 = vpop.f32.mrf.mxu0
    %v605 = vadd.f32 0.0, %v604
    %v606 = vpop.f32.mrf.mxu0
    %v607 = vpop.f32.mrf.mxu0
    %v608 = vadd.f32 0.0, %v607
    %v609 = vpop.f32.mrf.mxu0
    %610 = vmatprep.mubr.bf16.mxu0 0
    %611 = vmatmul.mubr.bf16.gmra.mxu0 %v456
    %v612 = vpop.f32.mrf.mxu0
    %v613 = vadd.f32 0.0, %v612
    %v614 = vpop.f32.mrf.mxu0
    %v615 = vpop.f32.mrf.mxu0
    %v616 = vadd.f32 0.0, %v615
    %v617 = vpop.f32.mrf.mxu0
    %618 = vdwg.mxu0
    %v619 = vpack.c.bf16 %v560, %v557
    %v620 = vpack.c.bf16 %v568, %v565
    %v621 = vpack.c.bf16 %v576, %v573
    %v622 = vpack.c.bf16 %v584, %v581
    %v623 = vpack.c.bf16 %v592, %v589
    %v624 = vpack.c.bf16 %v600, %v597
    %v625 = vpack.c.bf16 %v608, %v605
    %v626 = vpack.c.bf16 %v616, %v613
    %s627 = scalar_lea.vmem %s3, 1
    %v628 = vld [vmem:[%s627] sm:$0x1]
    %v630 = vlaneseq
    %v631 = vshrl.u32 %v630, 7
    %v632 = vsub.s32 0, %v631
    %v633 = vrot.slane %v628, %v632
    %635 = vmatprep.subr.bf16.mxu0 0
    %636 = vmatpush1.bf16.msra.mxu0 %v626
    %637 = vmatprep.subr.bf16.mxu0 0
    %638 = vmatpush1.bf16.msra.mxu0 %v625
    %639 = vmatprep.subr.bf16.mxu0 0
    %640 = vmatpush1.bf16.msra.mxu0 %v624
    %641 = vmatprep.subr.bf16.mxu0 0
    %642 = vmatpush1.bf16.msra.mxu0 %v623
    %643 = vmatprep.subr.bf16.mxu0 0
    %644 = vmatpush1.bf16.msra.mxu0 %v622
    %645 = vmatprep.subr.bf16.mxu0 0
    %646 = vmatpush1.bf16.msra.mxu0 %v621
    %647 = vmatprep.subr.bf16.mxu0 0
    %648 = vmatpush1.bf16.msra.mxu0 %v620
    %649 = vmatprep.subr.bf16.mxu0 0
    %650 = vmatpush1.bf16.msra.mxu0 %v619
    %651 = vmatprep.subr.bf16.mxu0 0
    %652 = vmatpush2.bf16.msra.mxu0 0
    %653 = vmatprep.subr.bf16.mxu0 0
    %654 = vmatpush2.bf16.msra.mxu0 0
    %655 = vmatprep.subr.bf16.mxu0 0
    %656 = vmatpush2.bf16.msra.mxu0 0
    %657 = vmatprep.subr.bf16.mxu0 0
    %658 = vmatpush2.bf16.msra.mxu0 0
    %659 = vmatprep.subr.bf16.mxu0 0
    %660 = vmatpush2.bf16.msra.mxu0 0
    %661 = vmatprep.subr.bf16.mxu0 0
    %662 = vmatpush2.bf16.msra.mxu0 0
    %663 = vmatprep.subr.bf16.mxu0 0
    %664 = vmatpush2.bf16.msra.mxu0 0
    %665 = vmatprep.subr.bf16.mxu0 0
    %666 = vmatpush2.bf16.msra.mxu0 0
    %667 = vmatprep.mubr.bf16.mxu0 0
    %668 = vmatmul.mubr.bf16.gmra.mxu0 %v320
    %v669 = vpop.f32.mrf.mxu0
    %v670 = vadd.f32 %v633, %v669
    %v671 = vpop.f32.mrf.mxu0
    %v672 = vpop.f32.mrf.mxu0
    %v673 = vadd.f32 %v633, %v672
    %v674 = vpop.f32.mrf.mxu0
    %675 = vmatprep.mubr.bf16.mxu0 0
    %676 = vmatmul.mubr.bf16.gmra.mxu0 %v321
    %v677 = vpop.f32.mrf.mxu0
    %v678 = vadd.f32 %v633, %v677
    %v679 = vpop.f32.mrf.mxu0
    %v680 = vpop.f32.mrf.mxu0
    %v681 = vadd.f32 %v633, %v680
    %v682 = vpop.f32.mrf.mxu0
    %683 = vmatprep.mubr.bf16.mxu0 0
    %684 = vmatmul.mubr.bf16.gmra.mxu0 %v322
    %v685 = vpop.f32.mrf.mxu0
    %v686 = vadd.f32 %v633, %v685
    %v687 = vpop.f32.mrf.mxu0
    %v688 = vpop.f32.mrf.mxu0
    %v689 = vadd.f32 %v633, %v688
    %v690 = vpop.f32.mrf.mxu0
    %691 = vmatprep.mubr.bf16.mxu0 0
    %692 = vmatmul.mubr.bf16.gmra.mxu0 %v323
    %v693 = vpop.f32.mrf.mxu0
    %v694 = vadd.f32 %v633, %v693
    %v695 = vpop.f32.mrf.mxu0
    %v696 = vpop.f32.mrf.mxu0
    %v697 = vadd.f32 %v633, %v696
    %v698 = vpop.f32.mrf.mxu0
    %699 = vmatprep.mubr.bf16.mxu0 0
    %700 = vmatmul.mubr.bf16.gmra.mxu0 %v324
    %v701 = vpop.f32.mrf.mxu0
    %v702 = vadd.f32 %v633, %v701
    %v703 = vpop.f32.mrf.mxu0
    %v704 = vpop.f32.mrf.mxu0
    %v705 = vadd.f32 %v633, %v704
    %v706 = vpop.f32.mrf.mxu0
    %707 = vmatprep.mubr.bf16.mxu0 0
    %708 = vmatmul.mubr.bf16.gmra.mxu0 %v325
    %v709 = vpop.f32.mrf.mxu0
    %v710 = vadd.f32 %v633, %v709
    %v711 = vpop.f32.mrf.mxu0
    %v712 = vpop.f32.mrf.mxu0
    %v713 = vadd.f32 %v633, %v712
    %v714 = vpop.f32.mrf.mxu0
    %715 = vmatprep.mubr.bf16.mxu0 0
    %716 = vmatmul.mubr.bf16.gmra.mxu0 %v326
    %v717 = vpop.f32.mrf.mxu0
    %v718 = vadd.f32 %v633, %v717
    %v719 = vpop.f32.mrf.mxu0
    %v720 = vpop.f32.mrf.mxu0
    %v721 = vadd.f32 %v633, %v720
    %v722 = vpop.f32.mrf.mxu0
    %723 = vmatprep.mubr.bf16.mxu0 0
    %724 = vmatmul.mubr.bf16.gmra.mxu0 %v327
    %v725 = vpop.f32.mrf.mxu0
    %v726 = vadd.f32 %v633, %v725
    %v727 = vpop.f32.mrf.mxu0
    %v728 = vpop.f32.mrf.mxu0
    %v729 = vadd.f32 %v633, %v728
    %v730 = vpop.f32.mrf.mxu0
    %731 = vdwg.mxu0
    %v732 = vmax.f32 %v670, 0.0
    %v733 = vmax.f32 %v673, 0.0
    %v734 = vmax.f32 %v678, 0.0
    %v735 = vmax.f32 %v681, 0.0
    %v736 = vmax.f32 %v686, 0.0
    %v737 = vmax.f32 %v689, 0.0
    %v738 = vmax.f32 %v694, 0.0
    %v739 = vmax.f32 %v697, 0.0
    %v740 = vmax.f32 %v702, 0.0
    %v741 = vmax.f32 %v705, 0.0
    %v742 = vmax.f32 %v710, 0.0
    %v743 = vmax.f32 %v713, 0.0
    %v744 = vmax.f32 %v718, 0.0
    %v745 = vmax.f32 %v721, 0.0
    %v746 = vmax.f32 %v726, 0.0
    %v747 = vmax.f32 %v729, 0.0
    %v748 = vpack.c.bf16 %v733, %v732
    %v749 = vpack.c.bf16 %v735, %v734
    %v750 = vpack.c.bf16 %v737, %v736
    %v751 = vpack.c.bf16 %v739, %v738
    %v752 = vpack.c.bf16 %v741, %v740
    %v753 = vpack.c.bf16 %v743, %v742
    %v754 = vpack.c.bf16 %v745, %v744
    %v755 = vpack.c.bf16 %v747, %v746
    %s756 = scalar_lea.vmem [#allocation2], 128
    %v757 = vld [vmem:[%s756] sm:$0xf]
    %v758 = vld [vmem:[%s756 + $0x4] sm:$0xf]
    %v759 = vld [vmem:[%s756 + $0x8] sm:$0xf]
    %v760 = vld [vmem:[%s756 + $0xc] sm:$0xf]
    %v761 = vld [vmem:[%s756 + $0x10] sm:$0xf]
    %v762 = vld [vmem:[%s756 + $0x14] sm:$0xf]
    %v763 = vld [vmem:[%s756 + $0x18] sm:$0xf]
    %v764 = vld [vmem:[%s756 + $0x1c] sm:$0xf]
    %v765 = vld [vmem:[%s756 + $0x20] sm:$0xf]
    %v766 = vld [vmem:[%s756 + $0x24] sm:$0xf]
    %v767 = vld [vmem:[%s756 + $0x28] sm:$0xf]
    %v768 = vld [vmem:[%s756 + $0x2c] sm:$0xf]
    %v769 = vld [vmem:[%s756 + $0x30] sm:$0xf]
    %v770 = vld [vmem:[%s756 + $0x34] sm:$0xf]
    %v771 = vld [vmem:[%s756 + $0x38] sm:$0xf]
    %v772 = vld [vmem:[%s756 + $0x3c] sm:$0xf]
    %v789 = vunpack.c.l.b16 %v757
    %v790 = vunpack.c.l.b16 %v758
    %v791 = vunpack.c.l.b16 %v759
    %v792 = vunpack.c.l.b16 %v760
    %v793 = vunpack.c.l.b16 %v761
    %v794 = vunpack.c.l.b16 %v762
    %v795 = vunpack.c.l.b16 %v763
    %v796 = vunpack.c.l.b16 %v764
    %v797 = vunpack.c.l.b16 %v765
    %v798 = vunpack.c.l.b16 %v766
    %v799 = vunpack.c.l.b16 %v767
    %v800 = vunpack.c.l.b16 %v768
    %v801 = vunpack.c.l.b16 %v769
    %v802 = vunpack.c.l.b16 %v770
    %v803 = vunpack.c.l.b16 %v771
    %v804 = vunpack.c.l.b16 %v772
    %v805 = vpack.c.b16 %v790, %v789
    %v806 = vpack.c.b16 %v792, %v791
    %v807 = vpack.c.b16 %v794, %v793
    %v808 = vpack.c.b16 %v796, %v795
    %v809 = vpack.c.b16 %v798, %v797
    %v810 = vpack.c.b16 %v800, %v799
    %v811 = vpack.c.b16 %v802, %v801
    %v812 = vpack.c.b16 %v804, %v803
    %821 = vmatprep.subr.bf16.mxu0 0
    %822 = vmatpush1.bf16.msra.mxu0 %v812
    %823 = vmatprep.subr.bf16.mxu0 0
    %824 = vmatpush1.bf16.msra.mxu0 %v811
    %825 = vmatprep.subr.bf16.mxu0 0
    %826 = vmatpush1.bf16.msra.mxu0 %v810
    %827 = vmatprep.subr.bf16.mxu0 0
    %828 = vmatpush1.bf16.msra.mxu0 %v809
    %829 = vmatprep.subr.bf16.mxu0 0
    %830 = vmatpush1.bf16.msra.mxu0 %v808
    %831 = vmatprep.subr.bf16.mxu0 0
    %832 = vmatpush1.bf16.msra.mxu0 %v807
    %833 = vmatprep.subr.bf16.mxu0 0
    %834 = vmatpush1.bf16.msra.mxu0 %v806
    %835 = vmatprep.subr.bf16.mxu0 0
    %836 = vmatpush1.bf16.msra.mxu0 %v805
    %837 = vmatprep.subr.bf16.mxu0 0
    %838 = vmatpush2.bf16.msra.mxu0 0
    %839 = vmatprep.subr.bf16.mxu0 0
    %840 = vmatpush2.bf16.msra.mxu0 0
    %841 = vmatprep.subr.bf16.mxu0 0
    %842 = vmatpush2.bf16.msra.mxu0 0
    %843 = vmatprep.subr.bf16.mxu0 0
    %844 = vmatpush2.bf16.msra.mxu0 0
    %845 = vmatprep.subr.bf16.mxu0 0
    %846 = vmatpush2.bf16.msra.mxu0 0
    %847 = vmatprep.subr.bf16.mxu0 0
    %848 = vmatpush2.bf16.msra.mxu0 0
    %849 = vmatprep.subr.bf16.mxu0 0
    %850 = vmatpush2.bf16.msra.mxu0 0
    %851 = vmatprep.subr.bf16.mxu0 0
    %852 = vmatpush2.bf16.msra.mxu0 0
    %853 = vmatprep.mubr.bf16.mxu0 0
    %854 = vmatmul.mubr.bf16.gmra.mxu0 %v748
    %v855 = vpop.f32.mrf.mxu0
    %v856 = vadd.f32 0.0, %v855
    %v857 = vpop.f32.mrf.mxu0
    %v858 = vpop.f32.mrf.mxu0
    %v859 = vadd.f32 0.0, %v858
    %v860 = vpop.f32.mrf.mxu0
    %861 = vmatprep.mubr.bf16.mxu0 0
    %862 = vmatmul.mubr.bf16.gmra.mxu0 %v749
    %v863 = vpop.f32.mrf.mxu0
    %v864 = vadd.f32 0.0, %v863
    %v865 = vpop.f32.mrf.mxu0
    %v866 = vpop.f32.mrf.mxu0
    %v867 = vadd.f32 0.0, %v866
    %v868 = vpop.f32.mrf.mxu0
    %869 = vmatprep.mubr.bf16.mxu0 0
    %870 = vmatmul.mubr.bf16.gmra.mxu0 %v750
    %v871 = vpop.f32.mrf.mxu0
    %v872 = vadd.f32 0.0, %v871
    %v873 = vpop.f32.mrf.mxu0
    %v874 = vpop.f32.mrf.mxu0
    %v875 = vadd.f32 0.0, %v874
    %v876 = vpop.f32.mrf.mxu0
    %877 = vmatprep.mubr.bf16.mxu0 0
    %878 = vmatmul.mubr.bf16.gmra.mxu0 %v751
    %v879 = vpop.f32.mrf.mxu0
    %v880 = vadd.f32 0.0, %v879
    %v881 = vpop.f32.mrf.mxu0
    %v882 = vpop.f32.mrf.mxu0
    %v883 = vadd.f32 0.0, %v882
    %v884 = vpop.f32.mrf.mxu0
    %885 = vmatprep.mubr.bf16.mxu0 0
    %886 = vmatmul.mubr.bf16.gmra.mxu0 %v752
    %v887 = vpop.f32.mrf.mxu0
    %v888 = vadd.f32 0.0, %v887
    %v889 = vpop.f32.mrf.mxu0
    %v890 = vpop.f32.mrf.mxu0
    %v891 = vadd.f32 0.0, %v890
    %v892 = vpop.f32.mrf.mxu0
    %893 = vmatprep.mubr.bf16.mxu0 0
    %894 = vmatmul.mubr.bf16.gmra.mxu0 %v753
    %v895 = vpop.f32.mrf.mxu0
    %v896 = vadd.f32 0.0, %v895
    %v897 = vpop.f32.mrf.mxu0
    %v898 = vpop.f32.mrf.mxu0
    %v899 = vadd.f32 0.0, %v898
    %v900 = vpop.f32.mrf.mxu0
    %901 = vmatprep.mubr.bf16.mxu0 0
    %902 = vmatmul.mubr.bf16.gmra.mxu0 %v754
    %v903 = vpop.f32.mrf.mxu0
    %v904 = vadd.f32 0.0, %v903
    %v905 = vpop.f32.mrf.mxu0
    %v906 = vpop.f32.mrf.mxu0
    %v907 = vadd.f32 0.0, %v906
    %v908 = vpop.f32.mrf.mxu0
    %909 = vmatprep.mubr.bf16.mxu0 0
    %910 = vmatmul.mubr.bf16.gmra.mxu0 %v755
    %v911 = vpop.f32.mrf.mxu0
    %v912 = vadd.f32 0.0, %v911
    %v913 = vpop.f32.mrf.mxu0
    %v914 = vpop.f32.mrf.mxu0
    %v915 = vadd.f32 0.0, %v914
    %v916 = vpop.f32.mrf.mxu0
    %917 = vdwg.mxu0
    %v918 = vpack.c.bf16 %v859, %v856
    %v919 = vpack.c.bf16 %v867, %v864
    %v920 = vpack.c.bf16 %v875, %v872
    %v921 = vpack.c.bf16 %v883, %v880
    %v922 = vpack.c.bf16 %v891, %v888
    %v923 = vpack.c.bf16 %v899, %v896
    %v924 = vpack.c.bf16 %v907, %v904
    %v925 = vpack.c.bf16 %v915, %v912
    %s926 = scalar_lea.vmem %s3, 2
    %v927 = vld [vmem:[%s926] sm:$0x1]
    %v929 = vlaneseq
    %v930 = vshrl.u32 %v929, 7
    %v931 = vsub.s32 0, %v930
    %v932 = vrot.slane %v927, %v931
    %934 = vmatprep.subr.bf16.mxu0 0
    %935 = vmatpush1.bf16.msra.mxu0 %v925
    %936 = vmatprep.subr.bf16.mxu0 0
    %937 = vmatpush1.bf16.msra.mxu0 %v924
    %938 = vmatprep.subr.bf16.mxu0 0
    %939 = vmatpush1.bf16.msra.mxu0 %v923
    %940 = vmatprep.subr.bf16.mxu0 0
    %941 = vmatpush1.bf16.msra.mxu0 %v922
    %942 = vmatprep.subr.bf16.mxu0 0
    %943 = vmatpush1.bf16.msra.mxu0 %v921
    %944 = vmatprep.subr.bf16.mxu0 0
    %945 = vmatpush1.bf16.msra.mxu0 %v920
    %946 = vmatprep.subr.bf16.mxu0 0
    %947 = vmatpush1.bf16.msra.mxu0 %v919
    %948 = vmatprep.subr.bf16.mxu0 0
    %949 = vmatpush1.bf16.msra.mxu0 %v918
    %950 = vmatprep.subr.bf16.mxu0 0
    %951 = vmatpush2.bf16.msra.mxu0 0
    %952 = vmatprep.subr.bf16.mxu0 0
    %953 = vmatpush2.bf16.msra.mxu0 0
    %954 = vmatprep.subr.bf16.mxu0 0
    %955 = vmatpush2.bf16.msra.mxu0 0
    %956 = vmatprep.subr.bf16.mxu0 0
    %957 = vmatpush2.bf16.msra.mxu0 0
    %958 = vmatprep.subr.bf16.mxu0 0
    %959 = vmatpush2.bf16.msra.mxu0 0
    %960 = vmatprep.subr.bf16.mxu0 0
    %961 = vmatpush2.bf16.msra.mxu0 0
    %962 = vmatprep.subr.bf16.mxu0 0
    %963 = vmatpush2.bf16.msra.mxu0 0
    %964 = vmatprep.subr.bf16.mxu0 0
    %965 = vmatpush2.bf16.msra.mxu0 0
    %966 = vmatprep.mubr.bf16.mxu0 0
    %967 = vmatmul.mubr.bf16.gmra.mxu0 %v320
    %v968 = vpop.f32.mrf.mxu0
    %v969 = vadd.f32 %v932, %v968
    %v970 = vpop.f32.mrf.mxu0
    %v971 = vpop.f32.mrf.mxu0
    %v972 = vadd.f32 %v932, %v971
    %v973 = vpop.f32.mrf.mxu0
    %974 = vmatprep.mubr.bf16.mxu0 0
    %975 = vmatmul.mubr.bf16.gmra.mxu0 %v321
    %v976 = vpop.f32.mrf.mxu0
    %v977 = vadd.f32 %v932, %v976
    %v978 = vpop.f32.mrf.mxu0
    %v979 = vpop.f32.mrf.mxu0
    %v980 = vadd.f32 %v932, %v979
    %v981 = vpop.f32.mrf.mxu0
    %982 = vmatprep.mubr.bf16.mxu0 0
    %983 = vmatmul.mubr.bf16.gmra.mxu0 %v322
    %v984 = vpop.f32.mrf.mxu0
    %v985 = vadd.f32 %v932, %v984
    %v986 = vpop.f32.mrf.mxu0
    %v987 = vpop.f32.mrf.mxu0
    %v988 = vadd.f32 %v932, %v987
    %v989 = vpop.f32.mrf.mxu0
    %990 = vmatprep.mubr.bf16.mxu0 0
    %991 = vmatmul.mubr.bf16.gmra.mxu0 %v323
    %v992 = vpop.f32.mrf.mxu0
    %v993 = vadd.f32 %v932, %v992
    %v994 = vpop.f32.mrf.mxu0
    %v995 = vpop.f32.mrf.mxu0
    %v996 = vadd.f32 %v932, %v995
    %v997 = vpop.f32.mrf.mxu0
    %998 = vmatprep.mubr.bf16.mxu0 0
    %999 = vmatmul.mubr.bf16.gmra.mxu0 %v324
    %v1000 = vpop.f32.mrf.mxu0
    %v1001 = vadd.f32 %v932, %v1000
    %v1002 = vpop.f32.mrf.mxu0
    %v1003 = vpop.f32.mrf.mxu0
    %v1004 = vadd.f32 %v932, %v1003
    %v1005 = vpop.f32.mrf.mxu0
    %1006 = vmatprep.mubr.bf16.mxu0 0
    %1007 = vmatmul.mubr.bf16.gmra.mxu0 %v325
    %v1008 = vpop.f32.mrf.mxu0
    %v1009 = vadd.f32 %v932, %v1008
    %v1010 = vpop.f32.mrf.mxu0
    %v1011 = vpop.f32.mrf.mxu0
    %v1012 = vadd.f32 %v932, %v1011
    %v1013 = vpop.f32.mrf.mxu0
    %1014 = vmatprep.mubr.bf16.mxu0 0
    %1015 = vmatmul.mubr.bf16.gmra.mxu0 %v326
    %v1016 = vpop.f32.mrf.mxu0
    %v1017 = vadd.f32 %v932, %v1016
    %v1018 = vpop.f32.mrf.mxu0
    %v1019 = vpop.f32.mrf.mxu0
    %v1020 = vadd.f32 %v932, %v1019
    %v1021 = vpop.f32.mrf.mxu0
    %1022 = vmatprep.mubr.bf16.mxu0 0
    %1023 = vmatmul.mubr.bf16.gmra.mxu0 %v327
    %v1024 = vpop.f32.mrf.mxu0
    %v1025 = vadd.f32 %v932, %v1024
    %v1026 = vpop.f32.mrf.mxu0
    %v1027 = vpop.f32.mrf.mxu0
    %v1028 = vadd.f32 %v932, %v1027
    %v1029 = vpop.f32.mrf.mxu0
    %1030 = vdwg.mxu0
    %v1031 = vunpack.c.l.bf16 %v449
    %v1032 = vunpack.c.h.bf16 %v449
    %v1033 = vunpack.c.l.bf16 %v450
    %v1034 = vunpack.c.h.bf16 %v450
    %v1035 = vunpack.c.l.bf16 %v451
    %v1036 = vunpack.c.h.bf16 %v451
    %v1037 = vunpack.c.l.bf16 %v452
    %v1038 = vunpack.c.h.bf16 %v452
    %v1039 = vunpack.c.l.bf16 %v453
    %v1040 = vunpack.c.h.bf16 %v453
    %v1041 = vunpack.c.l.bf16 %v454
    %v1042 = vunpack.c.h.bf16 %v454
    %v1043 = vunpack.c.l.bf16 %v455
    %v1044 = vunpack.c.h.bf16 %v455
    %v1045 = vunpack.c.l.bf16 %v456
    %v1046 = vunpack.c.h.bf16 %v456
    %v1047 = vadd.f32 %v969, %v1031
    %v1048 = vadd.f32 %v972, %v1032
    %v1049 = vadd.f32 %v977, %v1033
    %v1050 = vadd.f32 %v980, %v1034
    %v1051 = vadd.f32 %v985, %v1035
    %v1052 = vadd.f32 %v988, %v1036
    %v1053 = vadd.f32 %v993, %v1037
    %v1054 = vadd.f32 %v996, %v1038
    %v1055 = vadd.f32 %v1001, %v1039
    %v1056 = vadd.f32 %v1004, %v1040
    %v1057 = vadd.f32 %v1009, %v1041
    %v1058 = vadd.f32 %v1012, %v1042
    %v1059 = vadd.f32 %v1017, %v1043
    %v1060 = vadd.f32 %v1020, %v1044
    %v1061 = vadd.f32 %v1025, %v1045
    %v1062 = vadd.f32 %v1028, %v1046
    %v1063 = vmax.f32 %v1047, 0.0
    %v1064 = vmax.f32 %v1048, 0.0
    %v1065 = vmax.f32 %v1049, 0.0
    %v1066 = vmax.f32 %v1050, 0.0
    %v1067 = vmax.f32 %v1051, 0.0
    %v1068 = vmax.f32 %v1052, 0.0
    %v1069 = vmax.f32 %v1053, 0.0
    %v1070 = vmax.f32 %v1054, 0.0
    %v1071 = vmax.f32 %v1055, 0.0
    %v1072 = vmax.f32 %v1056, 0.0
    %v1073 = vmax.f32 %v1057, 0.0
    %v1074 = vmax.f32 %v1058, 0.0
    %v1075 = vmax.f32 %v1059, 0.0
    %v1076 = vmax.f32 %v1060, 0.0
    %v1077 = vmax.f32 %v1061, 0.0
    %v1078 = vmax.f32 %v1062, 0.0
    %v1079 = vpack.c.bf16 %v1064, %v1063
    %v1080 = vpack.c.bf16 %v1066, %v1065
    %v1081 = vpack.c.bf16 %v1068, %v1067
    %v1082 = vpack.c.bf16 %v1070, %v1069
    %v1083 = vpack.c.bf16 %v1072, %v1071
    %v1084 = vpack.c.bf16 %v1074, %v1073
    %v1085 = vpack.c.bf16 %v1076, %v1075
    %v1086 = vpack.c.bf16 %v1078, %v1077
    %s1087 = scalar_lea.vmem [#allocation2], 192
    %v1088 = vld [vmem:[%s1087] sm:$0xf]
    %v1089 = vld [vmem:[%s1087 + $0x4] sm:$0xf]
    %v1090 = vld [vmem:[%s1087 + $0x8] sm:$0xf]
    %v1091 = vld [vmem:[%s1087 + $0xc] sm:$0xf]
    %v1092 = vld [vmem:[%s1087 + $0x10] sm:$0xf]
    %v1093 = vld [vmem:[%s1087 + $0x14] sm:$0xf]
    %v1094 = vld [vmem:[%s1087 + $0x18] sm:$0xf]
    %v1095 = vld [vmem:[%s1087 + $0x1c] sm:$0xf]
    %v1096 = vld [vmem:[%s1087 + $0x20] sm:$0xf]
    %v1097 = vld [vmem:[%s1087 + $0x24] sm:$0xf]
    %v1098 = vld [vmem:[%s1087 + $0x28] sm:$0xf]
    %v1099 = vld [vmem:[%s1087 + $0x2c] sm:$0xf]
    %v1100 = vld [vmem:[%s1087 + $0x30] sm:$0xf]
    %v1101 = vld [vmem:[%s1087 + $0x34] sm:$0xf]
    %v1102 = vld [vmem:[%s1087 + $0x38] sm:$0xf]
    %v1103 = vld [vmem:[%s1087 + $0x3c] sm:$0xf]
    %v1120 = vunpack.c.l.b16 %v1088
    %v1121 = vunpack.c.l.b16 %v1089
    %v1122 = vunpack.c.l.b16 %v1090
    %v1123 = vunpack.c.l.b16 %v1091
    %v1124 = vunpack.c.l.b16 %v1092
    %v1125 = vunpack.c.l.b16 %v1093
    %v1126 = vunpack.c.l.b16 %v1094
    %v1127 = vunpack.c.l.b16 %v1095
    %v1128 = vunpack.c.l.b16 %v1096
    %v1129 = vunpack.c.l.b16 %v1097
    %v1130 = vunpack.c.l.b16 %v1098
    %v1131 = vunpack.c.l.b16 %v1099
    %v1132 = vunpack.c.l.b16 %v1100
    %v1133 = vunpack.c.l.b16 %v1101
    %v1134 = vunpack.c.l.b16 %v1102
    %v1135 = vunpack.c.l.b16 %v1103
    %v1136 = vpack.c.b16 %v1121, %v1120
    %v1137 = vpack.c.b16 %v1123, %v1122
    %v1138 = vpack.c.b16 %v1125, %v1124
    %v1139 = vpack.c.b16 %v1127, %v1126
    %v1140 = vpack.c.b16 %v1129, %v1128
    %v1141 = vpack.c.b16 %v1131, %v1130
    %v1142 = vpack.c.b16 %v1133, %v1132
    %v1143 = vpack.c.b16 %v1135, %v1134
    %1152 = vmatprep.subr.bf16.mxu0 0
    %1153 = vmatpush1.bf16.msra.mxu0 %v1143
    %1154 = vmatprep.subr.bf16.mxu0 0
    %1155 = vmatpush1.bf16.msra.mxu0 %v1142
    %1156 = vmatprep.subr.bf16.mxu0 0
    %1157 = vmatpush1.bf16.msra.mxu0 %v1141
    %1158 = vmatprep.subr.bf16.mxu0 0
    %1159 = vmatpush1.bf16.msra.mxu0 %v1140
    %1160 = vmatprep.subr.bf16.mxu0 0
    %1161 = vmatpush1.bf16.msra.mxu0 %v1139
    %1162 = vmatprep.subr.bf16.mxu0 0
    %1163 = vmatpush1.bf16.msra.mxu0 %v1138
    %1164 = vmatprep.subr.bf16.mxu0 0
    %1165 = vmatpush1.bf16.msra.mxu0 %v1137
    %1166 = vmatprep.subr.bf16.mxu0 0
    %1167 = vmatpush1.bf16.msra.mxu0 %v1136
    %1168 = vmatprep.subr.bf16.mxu0 0
    %1169 = vmatpush2.bf16.msra.mxu0 0
    %1170 = vmatprep.subr.bf16.mxu0 0
    %1171 = vmatpush2.bf16.msra.mxu0 0
    %1172 = vmatprep.subr.bf16.mxu0 0
    %1173 = vmatpush2.bf16.msra.mxu0 0
    %1174 = vmatprep.subr.bf16.mxu0 0
    %1175 = vmatpush2.bf16.msra.mxu0 0
    %1176 = vmatprep.subr.bf16.mxu0 0
    %1177 = vmatpush2.bf16.msra.mxu0 0
    %1178 = vmatprep.subr.bf16.mxu0 0
    %1179 = vmatpush2.bf16.msra.mxu0 0
    %1180 = vmatprep.subr.bf16.mxu0 0
    %1181 = vmatpush2.bf16.msra.mxu0 0
    %1182 = vmatprep.subr.bf16.mxu0 0
    %1183 = vmatpush2.bf16.msra.mxu0 0
    %1184 = vmatprep.mubr.bf16.mxu0 0
    %1185 = vmatmul.mubr.bf16.gmra.mxu0 %v1079
    %v1186 = vpop.f32.mrf.mxu0
    %v1187 = vadd.f32 0.0, %v1186
    %v1188 = vpop.f32.mrf.mxu0
    %v1189 = vpop.f32.mrf.mxu0
    %v1190 = vadd.f32 0.0, %v1189
    %v1191 = vpop.f32.mrf.mxu0
    %1192 = vmatprep.mubr.bf16.mxu0 0
    %1193 = vmatmul.mubr.bf16.gmra.mxu0 %v1080
    %v1194 = vpop.f32.mrf.mxu0
    %v1195 = vadd.f32 0.0, %v1194
    %v1196 = vpop.f32.mrf.mxu0
    %v1197 = vpop.f32.mrf.mxu0
    %v1198 = vadd.f32 0.0, %v1197
    %v1199 = vpop.f32.mrf.mxu0
    %1200 = vmatprep.mubr.bf16.mxu0 0
    %1201 = vmatmul.mubr.bf16.gmra.mxu0 %v1081
    %v1202 = vpop.f32.mrf.mxu0
    %v1203 = vadd.f32 0.0, %v1202
    %v1204 = vpop.f32.mrf.mxu0
    %v1205 = vpop.f32.mrf.mxu0
    %v1206 = vadd.f32 0.0, %v1205
    %v1207 = vpop.f32.mrf.mxu0
    %1208 = vmatprep.mubr.bf16.mxu0 0
    %1209 = vmatmul.mubr.bf16.gmra.mxu0 %v1082
    %v1210 = vpop.f32.mrf.mxu0
    %v1211 = vadd.f32 0.0, %v1210
    %v1212 = vpop.f32.mrf.mxu0
    %v1213 = vpop.f32.mrf.mxu0
    %v1214 = vadd.f32 0.0, %v1213
    %v1215 = vpop.f32.mrf.mxu0
    %1216 = vmatprep.mubr.bf16.mxu0 0
    %1217 = vmatmul.mubr.bf16.gmra.mxu0 %v1083
    %v1218 = vpop.f32.mrf.mxu0
    %v1219 = vadd.f32 0.0, %v1218
    %v1220 = vpop.f32.mrf.mxu0
    %v1221 = vpop.f32.mrf.mxu0
    %v1222 = vadd.f32 0.0, %v1221
    %v1223 = vpop.f32.mrf.mxu0
    %1224 = vmatprep.mubr.bf16.mxu0 0
    %1225 = vmatmul.mubr.bf16.gmra.mxu0 %v1084
    %v1226 = vpop.f32.mrf.mxu0
    %v1227 = vadd.f32 0.0, %v1226
    %v1228 = vpop.f32.mrf.mxu0
    %v1229 = vpop.f32.mrf.mxu0
    %v1230 = vadd.f32 0.0, %v1229
    %v1231 = vpop.f32.mrf.mxu0
    %1232 = vmatprep.mubr.bf16.mxu0 0
    %1233 = vmatmul.mubr.bf16.gmra.mxu0 %v1085
    %v1234 = vpop.f32.mrf.mxu0
    %v1235 = vadd.f32 0.0, %v1234
    %v1236 = vpop.f32.mrf.mxu0
    %v1237 = vpop.f32.mrf.mxu0
    %v1238 = vadd.f32 0.0, %v1237
    %v1239 = vpop.f32.mrf.mxu0
    %1240 = vmatprep.mubr.bf16.mxu0 0
    %1241 = vmatmul.mubr.bf16.gmra.mxu0 %v1086
    %v1242 = vpop.f32.mrf.mxu0
    %v1243 = vadd.f32 0.0, %v1242
    %v1244 = vpop.f32.mrf.mxu0
    %v1245 = vpop.f32.mrf.mxu0
    %v1246 = vadd.f32 0.0, %v1245
    %v1247 = vpop.f32.mrf.mxu0
    %1248 = vdwg.mxu0
    %v1249 = vpack.c.bf16 %v1190, %v1187
    %v1250 = vpack.c.bf16 %v1198, %v1195
    %v1251 = vpack.c.bf16 %v1206, %v1203
    %v1252 = vpack.c.bf16 %v1214, %v1211
    %v1253 = vpack.c.bf16 %v1222, %v1219
    %v1254 = vpack.c.bf16 %v1230, %v1227
    %v1255 = vpack.c.bf16 %v1238, %v1235
    %v1256 = vpack.c.bf16 %v1246, %v1243
    %s1257 = scalar_lea.vmem %s3, 3
    %v1258 = vld [vmem:[%s1257] sm:$0x1]
    %v1260 = vlaneseq
    %v1261 = vshrl.u32 %v1260, 7
    %v1262 = vsub.s32 0, %v1261
    %v1263 = vrot.slane %v1258, %v1262
    %1265 = vmatprep.subr.bf16.mxu0 0
    %1266 = vmatpush1.bf16.msra.mxu0 %v1256
    %1267 = vmatprep.subr.bf16.mxu0 0
    %1268 = vmatpush1.bf16.msra.mxu0 %v1255
    %1269 = vmatprep.subr.bf16.mxu0 0
    %1270 = vmatpush1.bf16.msra.mxu0 %v1254
    %1271 = vmatprep.subr.bf16.mxu0 0
    %1272 = vmatpush1.bf16.msra.mxu0 %v1253
    %1273 = vmatprep.subr.bf16.mxu0 0
    %1274 = vmatpush1.bf16.msra.mxu0 %v1252
    %1275 = vmatprep.subr.bf16.mxu0 0
    %1276 = vmatpush1.bf16.msra.mxu0 %v1251
    %1277 = vmatprep.subr.bf16.mxu0 0
    %1278 = vmatpush1.bf16.msra.mxu0 %v1250
    %1279 = vmatprep.subr.bf16.mxu0 0
    %1280 = vmatpush1.bf16.msra.mxu0 %v1249
    %1281 = vmatprep.subr.bf16.mxu0 0
    %1282 = vmatpush2.bf16.msra.mxu0 0
    %1283 = vmatprep.subr.bf16.mxu0 0
    %1284 = vmatpush2.bf16.msra.mxu0 0
    %1285 = vmatprep.subr.bf16.mxu0 0
    %1286 = vmatpush2.bf16.msra.mxu0 0
    %1287 = vmatprep.subr.bf16.mxu0 0
    %1288 = vmatpush2.bf16.msra.mxu0 0
    %1289 = vmatprep.subr.bf16.mxu0 0
    %1290 = vmatpush2.bf16.msra.mxu0 0
    %1291 = vmatprep.subr.bf16.mxu0 0
    %1292 = vmatpush2.bf16.msra.mxu0 0
    %1293 = vmatprep.subr.bf16.mxu0 0
    %1294 = vmatpush2.bf16.msra.mxu0 0
    %1295 = vmatprep.subr.bf16.mxu0 0
    %1296 = vmatpush2.bf16.msra.mxu0 0
    %1297 = vmatprep.mubr.bf16.mxu0 0
    %1298 = vmatmul.mubr.bf16.gmra.mxu0 %v320
    %v1299 = vpop.f32.mrf.mxu0
    %v1300 = vadd.f32 %v1263, %v1299
    %v1301 = vpop.f32.mrf.mxu0
    %v1302 = vpop.f32.mrf.mxu0
    %v1303 = vadd.f32 %v1263, %v1302
    %v1304 = vpop.f32.mrf.mxu0
    %1305 = vmatprep.mubr.bf16.mxu0 0
    %1306 = vmatmul.mubr.bf16.gmra.mxu0 %v321
    %v1307 = vpop.f32.mrf.mxu0
    %v1308 = vadd.f32 %v1263, %v1307
    %v1309 = vpop.f32.mrf.mxu0
    %v1310 = vpop.f32.mrf.mxu0
    %v1311 = vadd.f32 %v1263, %v1310
    %v1312 = vpop.f32.mrf.mxu0
    %1313 = vmatprep.mubr.bf16.mxu0 0
    %1314 = vmatmul.mubr.bf16.gmra.mxu0 %v322
    %v1315 = vpop.f32.mrf.mxu0
    %v1316 = vadd.f32 %v1263, %v1315
    %v1317 = vpop.f32.mrf.mxu0
    %v1318 = vpop.f32.mrf.mxu0
    %v1319 = vadd.f32 %v1263, %v1318
    %v1320 = vpop.f32.mrf.mxu0
    %1321 = vmatprep.mubr.bf16.mxu0 0
    %1322 = vmatmul.mubr.bf16.gmra.mxu0 %v323
    %v1323 = vpop.f32.mrf.mxu0
    %v1324 = vadd.f32 %v1263, %v1323
    %v1325 = vpop.f32.mrf.mxu0
    %v1326 = vpop.f32.mrf.mxu0
    %v1327 = vadd.f32 %v1263, %v1326
    %v1328 = vpop.f32.mrf.mxu0
    %1329 = vmatprep.mubr.bf16.mxu0 0
    %1330 = vmatmul.mubr.bf16.gmra.mxu0 %v324
    %v1331 = vpop.f32.mrf.mxu0
    %v1332 = vadd.f32 %v1263, %v1331
    %v1333 = vpop.f32.mrf.mxu0
    %v1334 = vpop.f32.mrf.mxu0
    %v1335 = vadd.f32 %v1263, %v1334
    %v1336 = vpop.f32.mrf.mxu0
    %1337 = vmatprep.mubr.bf16.mxu0 0
    %1338 = vmatmul.mubr.bf16.gmra.mxu0 %v325
    %v1339 = vpop.f32.mrf.mxu0
    %v1340 = vadd.f32 %v1263, %v1339
    %v1341 = vpop.f32.mrf.mxu0
    %v1342 = vpop.f32.mrf.mxu0
    %v1343 = vadd.f32 %v1263, %v1342
    %v1344 = vpop.f32.mrf.mxu0
    %1345 = vmatprep.mubr.bf16.mxu0 0
    %1346 = vmatmul.mubr.bf16.gmra.mxu0 %v326
    %v1347 = vpop.f32.mrf.mxu0
    %v1348 = vadd.f32 %v1263, %v1347
    %v1349 = vpop.f32.mrf.mxu0
    %v1350 = vpop.f32.mrf.mxu0
    %v1351 = vadd.f32 %v1263, %v1350
    %v1352 = vpop.f32.mrf.mxu0
    %1353 = vmatprep.mubr.bf16.mxu0 0
    %1354 = vmatmul.mubr.bf16.gmra.mxu0 %v327
    %v1355 = vpop.f32.mrf.mxu0
    %v1356 = vadd.f32 %v1263, %v1355
    %v1357 = vpop.f32.mrf.mxu0
    %v1358 = vpop.f32.mrf.mxu0
    %v1359 = vadd.f32 %v1263, %v1358
    %v1360 = vpop.f32.mrf.mxu0
    %1361 = vdwg.mxu0
    %v1362 = vmax.f32 %v1300, 0.0
    %v1363 = vmax.f32 %v1303, 0.0
    %v1364 = vmax.f32 %v1308, 0.0
    %v1365 = vmax.f32 %v1311, 0.0
    %v1366 = vmax.f32 %v1316, 0.0
    %v1367 = vmax.f32 %v1319, 0.0
    %v1368 = vmax.f32 %v1324, 0.0
    %v1369 = vmax.f32 %v1327, 0.0
    %v1370 = vmax.f32 %v1332, 0.0
    %v1371 = vmax.f32 %v1335, 0.0
    %v1372 = vmax.f32 %v1340, 0.0
    %v1373 = vmax.f32 %v1343, 0.0
    %v1374 = vmax.f32 %v1348, 0.0
    %v1375 = vmax.f32 %v1351, 0.0
    %v1376 = vmax.f32 %v1356, 0.0
    %v1377 = vmax.f32 %v1359, 0.0
    %v1378 = vpack.c.bf16 %v1363, %v1362
    %v1379 = vpack.c.bf16 %v1365, %v1364
    %v1380 = vpack.c.bf16 %v1367, %v1366
    %v1381 = vpack.c.bf16 %v1369, %v1368
    %v1382 = vpack.c.bf16 %v1371, %v1370
    %v1383 = vpack.c.bf16 %v1373, %v1372
    %v1384 = vpack.c.bf16 %v1375, %v1374
    %v1385 = vpack.c.bf16 %v1377, %v1376
    %s1386 = scalar_lea.vmem [#allocation2], 256
    %v1387 = vld [vmem:[%s1386] sm:$0xf]
    %v1388 = vld [vmem:[%s1386 + $0x4] sm:$0xf]
    %v1389 = vld [vmem:[%s1386 + $0x8] sm:$0xf]
    %v1390 = vld [vmem:[%s1386 + $0xc] sm:$0xf]
    %v1391 = vld [vmem:[%s1386 + $0x10] sm:$0xf]
    %v1392 = vld [vmem:[%s1386 + $0x14] sm:$0xf]
    %v1393 = vld [vmem:[%s1386 + $0x18] sm:$0xf]
    %v1394 = vld [vmem:[%s1386 + $0x1c] sm:$0xf]
    %v1395 = vld [vmem:[%s1386 + $0x20] sm:$0xf]
    %v1396 = vld [vmem:[%s1386 + $0x24] sm:$0xf]
    %v1397 = vld [vmem:[%s1386 + $0x28] sm:$0xf]
    %v1398 = vld [vmem:[%s1386 + $0x2c] sm:$0xf]
    %v1399 = vld [vmem:[%s1386 + $0x30] sm:$0xf]
    %v1400 = vld [vmem:[%s1386 + $0x34] sm:$0xf]
    %v1401 = vld [vmem:[%s1386 + $0x38] sm:$0xf]
    %v1402 = vld [vmem:[%s1386 + $0x3c] sm:$0xf]
    %v1419 = vunpack.c.l.b16 %v1387
    %v1420 = vunpack.c.l.b16 %v1388
    %v1421 = vunpack.c.l.b16 %v1389
    %v1422 = vunpack.c.l.b16 %v1390
    %v1423 = vunpack.c.l.b16 %v1391
    %v1424 = vunpack.c.l.b16 %v1392
    %v1425 = vunpack.c.l.b16 %v1393
    %v1426 = vunpack.c.l.b16 %v1394
    %v1427 = vunpack.c.l.b16 %v1395
    %v1428 = vunpack.c.l.b16 %v1396
    %v1429 = vunpack.c.l.b16 %v1397
    %v1430 = vunpack.c.l.b16 %v1398
    %v1431 = vunpack.c.l.b16 %v1399
    %v1432 = vunpack.c.l.b16 %v1400
    %v1433 = vunpack.c.l.b16 %v1401
    %v1434 = vunpack.c.l.b16 %v1402
    %v1435 = vpack.c.b16 %v1420, %v1419
    %v1436 = vpack.c.b16 %v1422, %v1421
    %v1437 = vpack.c.b16 %v1424, %v1423
    %v1438 = vpack.c.b16 %v1426, %v1425
    %v1439 = vpack.c.b16 %v1428, %v1427
    %v1440 = vpack.c.b16 %v1430, %v1429
    %v1441 = vpack.c.b16 %v1432, %v1431
    %v1442 = vpack.c.b16 %v1434, %v1433
    %1451 = vmatprep.subr.bf16.mxu0 0
    %1452 = vmatpush1.bf16.msra.mxu0 %v1442
    %1453 = vmatprep.subr.bf16.mxu0 0
    %1454 = vmatpush1.bf16.msra.mxu0 %v1441
    %1455 = vmatprep.subr.bf16.mxu0 0
    %1456 = vmatpush1.bf16.msra.mxu0 %v1440
    %1457 = vmatprep.subr.bf16.mxu0 0
    %1458 = vmatpush1.bf16.msra.mxu0 %v1439
    %1459 = vmatprep.subr.bf16.mxu0 0
    %1460 = vmatpush1.bf16.msra.mxu0 %v1438
    %1461 = vmatprep.subr.bf16.mxu0 0
    %1462 = vmatpush1.bf16.msra.mxu0 %v1437
    %1463 = vmatprep.subr.bf16.mxu0 0
    %1464 = vmatpush1.bf16.msra.mxu0 %v1436
    %1465 = vmatprep.subr.bf16.mxu0 0
    %1466 = vmatpush1.bf16.msra.mxu0 %v1435
    %1467 = vmatprep.subr.bf16.mxu0 0
    %1468 = vmatpush2.bf16.msra.mxu0 0
    %1469 = vmatprep.subr.bf16.mxu0 0
    %1470 = vmatpush2.bf16.msra.mxu0 0
    %1471 = vmatprep.subr.bf16.mxu0 0
    %1472 = vmatpush2.bf16.msra.mxu0 0
    %1473 = vmatprep.subr.bf16.mxu0 0
    %1474 = vmatpush2.bf16.msra.mxu0 0
    %1475 = vmatprep.subr.bf16.mxu0 0
    %1476 = vmatpush2.bf16.msra.mxu0 0
    %1477 = vmatprep.subr.bf16.mxu0 0
    %1478 = vmatpush2.bf16.msra.mxu0 0
    %1479 = vmatprep.subr.bf16.mxu0 0
    %1480 = vmatpush2.bf16.msra.mxu0 0
    %1481 = vmatprep.subr.bf16.mxu0 0
    %1482 = vmatpush2.bf16.msra.mxu0 0
    %1483 = vmatprep.mubr.bf16.mxu0 0
    %1484 = vmatmul.mubr.bf16.gmra.mxu0 %v1378
    %v1485 = vpop.f32.mrf.mxu0
    %v1486 = vadd.f32 0.0, %v1485
    %v1487 = vpop.f32.mrf.mxu0
    %v1488 = vpop.f32.mrf.mxu0
    %v1489 = vadd.f32 0.0, %v1488
    %v1490 = vpop.f32.mrf.mxu0
    %1491 = vmatprep.mubr.bf16.mxu0 0
    %1492 = vmatmul.mubr.bf16.gmra.mxu0 %v1379
    %v1493 = vpop.f32.mrf.mxu0
    %v1494 = vadd.f32 0.0, %v1493
    %v1495 = vpop.f32.mrf.mxu0
    %v1496 = vpop.f32.mrf.mxu0
    %v1497 = vadd.f32 0.0, %v1496
    %v1498 = vpop.f32.mrf.mxu0
    %1499 = vmatprep.mubr.bf16.mxu0 0
    %1500 = vmatmul.mubr.bf16.gmra.mxu0 %v1380
    %v1501 = vpop.f32.mrf.mxu0
    %v1502 = vadd.f32 0.0, %v1501
    %v1503 = vpop.f32.mrf.mxu0
    %v1504 = vpop.f32.mrf.mxu0
    %v1505 = vadd.f32 0.0, %v1504
    %v1506 = vpop.f32.mrf.mxu0
    %1507 = vmatprep.mubr.bf16.mxu0 0
    %1508 = vmatmul.mubr.bf16.gmra.mxu0 %v1381
    %v1509 = vpop.f32.mrf.mxu0
    %v1510 = vadd.f32 0.0, %v1509
    %v1511 = vpop.f32.mrf.mxu0
    %v1512 = vpop.f32.mrf.mxu0
    %v1513 = vadd.f32 0.0, %v1512
    %v1514 = vpop.f32.mrf.mxu0
    %1515 = vmatprep.mubr.bf16.mxu0 0
    %1516 = vmatmul.mubr.bf16.gmra.mxu0 %v1382
    %v1517 = vpop.f32.mrf.mxu0
    %v1518 = vadd.f32 0.0, %v1517
    %v1519 = vpop.f32.mrf.mxu0
    %v1520 = vpop.f32.mrf.mxu0
    %v1521 = vadd.f32 0.0, %v1520
    %v1522 = vpop.f32.mrf.mxu0
    %1523 = vmatprep.mubr.bf16.mxu0 0
    %1524 = vmatmul.mubr.bf16.gmra.mxu0 %v1383
    %v1525 = vpop.f32.mrf.mxu0
    %v1526 = vadd.f32 0.0, %v1525
    %v1527 = vpop.f32.mrf.mxu0
    %v1528 = vpop.f32.mrf.mxu0
    %v1529 = vadd.f32 0.0, %v1528
    %v1530 = vpop.f32.mrf.mxu0
    %1531 = vmatprep.mubr.bf16.mxu0 0
    %1532 = vmatmul.mubr.bf16.gmra.mxu0 %v1384
    %v1533 = vpop.f32.mrf.mxu0
    %v1534 = vadd.f32 0.0, %v1533
    %v1535 = vpop.f32.mrf.mxu0
    %v1536 = vpop.f32.mrf.mxu0
    %v1537 = vadd.f32 0.0, %v1536
    %v1538 = vpop.f32.mrf.mxu0
    %1539 = vmatprep.mubr.bf16.mxu0 0
    %1540 = vmatmul.mubr.bf16.gmra.mxu0 %v1385
    %v1541 = vpop.f32.mrf.mxu0
    %v1542 = vadd.f32 0.0, %v1541
    %v1543 = vpop.f32.mrf.mxu0
    %v1544 = vpop.f32.mrf.mxu0
    %v1545 = vadd.f32 0.0, %v1544
    %v1546 = vpop.f32.mrf.mxu0
    %1547 = vdwg.mxu0
    %v1548 = vpack.c.bf16 %v1489, %v1486
    %v1549 = vpack.c.bf16 %v1497, %v1494
    %v1550 = vpack.c.bf16 %v1505, %v1502
    %v1551 = vpack.c.bf16 %v1513, %v1510
    %v1552 = vpack.c.bf16 %v1521, %v1518
    %v1553 = vpack.c.bf16 %v1529, %v1526
    %v1554 = vpack.c.bf16 %v1537, %v1534
    %v1555 = vpack.c.bf16 %v1545, %v1542
    %s1556 = scalar_lea.vmem %s3, 4
    %v1557 = vld [vmem:[%s1556] sm:$0x1]
    %v1559 = vlaneseq
    %v1560 = vshrl.u32 %v1559, 7
    %v1561 = vsub.s32 0, %v1560
    %v1562 = vrot.slane %v1557, %v1561
    %1564 = vmatprep.subr.bf16.mxu0 0
    %1565 = vmatpush1.bf16.msra.mxu0 %v1555
    %1566 = vmatprep.subr.bf16.mxu0 0
    %1567 = vmatpush1.bf16.msra.mxu0 %v1554
    %1568 = vmatprep.subr.bf16.mxu0 0
    %1569 = vmatpush1.bf16.msra.mxu0 %v1553
    %1570 = vmatprep.subr.bf16.mxu0 0
    %1571 = vmatpush1.bf16.msra.mxu0 %v1552
    %1572 = vmatprep.subr.bf16.mxu0 0
    %1573 = vmatpush1.bf16.msra.mxu0 %v1551
    %1574 = vmatprep.subr.bf16.mxu0 0
    %1575 = vmatpush1.bf16.msra.mxu0 %v1550
    %1576 = vmatprep.subr.bf16.mxu0 0
    %1577 = vmatpush1.bf16.msra.mxu0 %v1549
    %1578 = vmatprep.subr.bf16.mxu0 0
    %1579 = vmatpush1.bf16.msra.mxu0 %v1548
    %1580 = vmatprep.subr.bf16.mxu0 0
    %1581 = vmatpush2.bf16.msra.mxu0 0
    %1582 = vmatprep.subr.bf16.mxu0 0
    %1583 = vmatpush2.bf16.msra.mxu0 0
    %1584 = vmatprep.subr.bf16.mxu0 0
    %1585 = vmatpush2.bf16.msra.mxu0 0
    %1586 = vmatprep.subr.bf16.mxu0 0
    %1587 = vmatpush2.bf16.msra.mxu0 0
    %1588 = vmatprep.subr.bf16.mxu0 0
    %1589 = vmatpush2.bf16.msra.mxu0 0
    %1590 = vmatprep.subr.bf16.mxu0 0
    %1591 = vmatpush2.bf16.msra.mxu0 0
    %1592 = vmatprep.subr.bf16.mxu0 0
    %1593 = vmatpush2.bf16.msra.mxu0 0
    %1594 = vmatprep.subr.bf16.mxu0 0
    %1595 = vmatpush2.bf16.msra.mxu0 0
    %1596 = vmatprep.mubr.bf16.mxu0 0
    %1597 = vmatmul.mubr.bf16.gmra.mxu0 %v320
    %v1598 = vpop.f32.mrf.mxu0
    %v1599 = vadd.f32 %v1562, %v1598
    %v1600 = vpop.f32.mrf.mxu0
    %v1601 = vpop.f32.mrf.mxu0
    %v1602 = vadd.f32 %v1562, %v1601
    %v1603 = vpop.f32.mrf.mxu0
    %1604 = vmatprep.mubr.bf16.mxu0 0
    %1605 = vmatmul.mubr.bf16.gmra.mxu0 %v321
    %v1606 = vpop.f32.mrf.mxu0
    %v1607 = vadd.f32 %v1562, %v1606
    %v1608 = vpop.f32.mrf.mxu0
    %v1609 = vpop.f32.mrf.mxu0
    %v1610 = vadd.f32 %v1562, %v1609
    %v1611 = vpop.f32.mrf.mxu0
    %1612 = vmatprep.mubr.bf16.mxu0 0
    %1613 = vmatmul.mubr.bf16.gmra.mxu0 %v322
    %v1614 = vpop.f32.mrf.mxu0
    %v1615 = vadd.f32 %v1562, %v1614
    %v1616 = vpop.f32.mrf.mxu0
    %v1617 = vpop.f32.mrf.mxu0
    %v1618 = vadd.f32 %v1562, %v1617
    %v1619 = vpop.f32.mrf.mxu0
    %1620 = vmatprep.mubr.bf16.mxu0 0
    %1621 = vmatmul.mubr.bf16.gmra.mxu0 %v323
    %v1622 = vpop.f32.mrf.mxu0
    %v1623 = vadd.f32 %v1562, %v1622
    %v1624 = vpop.f32.mrf.mxu0
    %v1625 = vpop.f32.mrf.mxu0
    %v1626 = vadd.f32 %v1562, %v1625
    %v1627 = vpop.f32.mrf.mxu0
    %1628 = vmatprep.mubr.bf16.mxu0 0
    %1629 = vmatmul.mubr.bf16.gmra.mxu0 %v324
    %v1630 = vpop.f32.mrf.mxu0
    %v1631 = vadd.f32 %v1562, %v1630
    %v1632 = vpop.f32.mrf.mxu0
    %v1633 = vpop.f32.mrf.mxu0
    %v1634 = vadd.f32 %v1562, %v1633
    %v1635 = vpop.f32.mrf.mxu0
    %1636 = vmatprep.mubr.bf16.mxu0 0
    %1637 = vmatmul.mubr.bf16.gmra.mxu0 %v325
    %v1638 = vpop.f32.mrf.mxu0
    %v1639 = vadd.f32 %v1562, %v1638
    %v1640 = vpop.f32.mrf.mxu0
    %v1641 = vpop.f32.mrf.mxu0
    %v1642 = vadd.f32 %v1562, %v1641
    %v1643 = vpop.f32.mrf.mxu0
    %1644 = vmatprep.mubr.bf16.mxu0 0
    %1645 = vmatmul.mubr.bf16.gmra.mxu0 %v326
    %v1646 = vpop.f32.mrf.mxu0
    %v1647 = vadd.f32 %v1562, %v1646
    %v1648 = vpop.f32.mrf.mxu0
    %v1649 = vpop.f32.mrf.mxu0
    %v1650 = vadd.f32 %v1562, %v1649
    %v1651 = vpop.f32.mrf.mxu0
    %1652 = vmatprep.mubr.bf16.mxu0 0
    %1653 = vmatmul.mubr.bf16.gmra.mxu0 %v327
    %v1654 = vpop.f32.mrf.mxu0
    %v1655 = vadd.f32 %v1562, %v1654
    %v1656 = vpop.f32.mrf.mxu0
    %v1657 = vpop.f32.mrf.mxu0
    %v1658 = vadd.f32 %v1562, %v1657
    %v1659 = vpop.f32.mrf.mxu0
    %1660 = vdwg.mxu0
    %v1661 = vunpack.c.l.bf16 %v1079
    %v1662 = vunpack.c.h.bf16 %v1079
    %v1663 = vunpack.c.l.bf16 %v1080
    %v1664 = vunpack.c.h.bf16 %v1080
    %v1665 = vunpack.c.l.bf16 %v1081
    %v1666 = vunpack.c.h.bf16 %v1081
    %v1667 = vunpack.c.l.bf16 %v1082
    %v1668 = vunpack.c.h.bf16 %v1082
    %v1669 = vunpack.c.l.bf16 %v1083
    %v1670 = vunpack.c.h.bf16 %v1083
    %v1671 = vunpack.c.l.bf16 %v1084
    %v1672 = vunpack.c.h.bf16 %v1084
    %v1673 = vunpack.c.l.bf16 %v1085
    %v1674 = vunpack.c.h.bf16 %v1085
    %v1675 = vunpack.c.l.bf16 %v1086
    %v1676 = vunpack.c.h.bf16 %v1086
    %v1677 = vadd.f32 %v1599, %v1661
    %v1678 = vadd.f32 %v1602, %v1662
    %v1679 = vadd.f32 %v1607, %v1663
    %v1680 = vadd.f32 %v1610, %v1664
    %v1681 = vadd.f32 %v1615, %v1665
    %v1682 = vadd.f32 %v1618, %v1666
    %v1683 = vadd.f32 %v1623, %v1667
    %v1684 = vadd.f32 %v1626, %v1668
    %v1685 = vadd.f32 %v1631, %v1669
    %v1686 = vadd.f32 %v1634, %v1670
    %v1687 = vadd.f32 %v1639, %v1671
    %v1688 = vadd.f32 %v1642, %v1672
    %v1689 = vadd.f32 %v1647, %v1673
    %v1690 = vadd.f32 %v1650, %v1674
    %v1691 = vadd.f32 %v1655, %v1675
    %v1692 = vadd.f32 %v1658, %v1676
    %v1693 = vmax.f32 %v1677, 0.0
    %v1694 = vmax.f32 %v1678, 0.0
    %v1695 = vmax.f32 %v1679, 0.0
    %v1696 = vmax.f32 %v1680, 0.0
    %v1697 = vmax.f32 %v1681, 0.0
    %v1698 = vmax.f32 %v1682, 0.0
    %v1699 = vmax.f32 %v1683, 0.0
    %v1700 = vmax.f32 %v1684, 0.0
    %v1701 = vmax.f32 %v1685, 0.0
    %v1702 = vmax.f32 %v1686, 0.0
    %v1703 = vmax.f32 %v1687, 0.0
    %v1704 = vmax.f32 %v1688, 0.0
    %v1705 = vmax.f32 %v1689, 0.0
    %v1706 = vmax.f32 %v1690, 0.0
    %v1707 = vmax.f32 %v1691, 0.0
    %v1708 = vmax.f32 %v1692, 0.0
    %v1709 = vpack.c.bf16 %v1694, %v1693
    %v1710 = vpack.c.bf16 %v1696, %v1695
    %v1711 = vpack.c.bf16 %v1698, %v1697
    %v1712 = vpack.c.bf16 %v1700, %v1699
    %v1713 = vpack.c.bf16 %v1702, %v1701
    %v1714 = vpack.c.bf16 %v1704, %v1703
    %v1715 = vpack.c.bf16 %v1706, %v1705
    %v1716 = vpack.c.bf16 %v1708, %v1707
    %s1717 = scalar_lea.vmem [#allocation2], 320
    %v1718 = vld [vmem:[%s1717] sm:$0xf]
    %v1719 = vld [vmem:[%s1717 + $0x4] sm:$0xf]
    %v1720 = vld [vmem:[%s1717 + $0x8] sm:$0xf]
    %v1721 = vld [vmem:[%s1717 + $0xc] sm:$0xf]
    %v1722 = vld [vmem:[%s1717 + $0x10] sm:$0xf]
    %v1723 = vld [vmem:[%s1717 + $0x14] sm:$0xf]
    %v1724 = vld [vmem:[%s1717 + $0x18] sm:$0xf]
    %v1725 = vld [vmem:[%s1717 + $0x1c] sm:$0xf]
    %v1726 = vld [vmem:[%s1717 + $0x20] sm:$0xf]
    %v1727 = vld [vmem:[%s1717 + $0x24] sm:$0xf]
    %v1728 = vld [vmem:[%s1717 + $0x28] sm:$0xf]
    %v1729 = vld [vmem:[%s1717 + $0x2c] sm:$0xf]
    %v1730 = vld [vmem:[%s1717 + $0x30] sm:$0xf]
    %v1731 = vld [vmem:[%s1717 + $0x34] sm:$0xf]
    %v1732 = vld [vmem:[%s1717 + $0x38] sm:$0xf]
    %v1733 = vld [vmem:[%s1717 + $0x3c] sm:$0xf]
    %v1750 = vunpack.c.l.b16 %v1718
    %v1751 = vunpack.c.l.b16 %v1719
    %v1752 = vunpack.c.l.b16 %v1720
    %v1753 = vunpack.c.l.b16 %v1721
    %v1754 = vunpack.c.l.b16 %v1722
    %v1755 = vunpack.c.l.b16 %v1723
    %v1756 = vunpack.c.l.b16 %v1724
    %v1757 = vunpack.c.l.b16 %v1725
    %v1758 = vunpack.c.l.b16 %v1726
    %v1759 = vunpack.c.l.b16 %v1727
    %v1760 = vunpack.c.l.b16 %v1728
    %v1761 = vunpack.c.l.b16 %v1729
    %v1762 = vunpack.c.l.b16 %v1730
    %v1763 = vunpack.c.l.b16 %v1731
    %v1764 = vunpack.c.l.b16 %v1732
    %v1765 = vunpack.c.l.b16 %v1733
    %v1766 = vpack.c.b16 %v1751, %v1750
    %v1767 = vpack.c.b16 %v1753, %v1752
    %v1768 = vpack.c.b16 %v1755, %v1754
    %v1769 = vpack.c.b16 %v1757, %v1756
    %v1770 = vpack.c.b16 %v1759, %v1758
    %v1771 = vpack.c.b16 %v1761, %v1760
    %v1772 = vpack.c.b16 %v1763, %v1762
    %v1773 = vpack.c.b16 %v1765, %v1764
    %1782 = vmatprep.subr.bf16.mxu0 0
    %1783 = vmatpush1.bf16.msra.mxu0 %v1773
    %1784 = vmatprep.subr.bf16.mxu0 0
    %1785 = vmatpush1.bf16.msra.mxu0 %v1772
    %1786 = vmatprep.subr.bf16.mxu0 0
    %1787 = vmatpush1.bf16.msra.mxu0 %v1771
    %1788 = vmatprep.subr.bf16.mxu0 0
    %1789 = vmatpush1.bf16.msra.mxu0 %v1770
    %1790 = vmatprep.subr.bf16.mxu0 0
    %1791 = vmatpush1.bf16.msra.mxu0 %v1769
    %1792 = vmatprep.subr.bf16.mxu0 0
    %1793 = vmatpush1.bf16.msra.mxu0 %v1768
    %1794 = vmatprep.subr.bf16.mxu0 0
    %1795 = vmatpush1.bf16.msra.mxu0 %v1767
    %1796 = vmatprep.subr.bf16.mxu0 0
    %1797 = vmatpush1.bf16.msra.mxu0 %v1766
    %1798 = vmatprep.subr.bf16.mxu0 0
    %1799 = vmatpush2.bf16.msra.mxu0 0
    %1800 = vmatprep.subr.bf16.mxu0 0
    %1801 = vmatpush2.bf16.msra.mxu0 0
    %1802 = vmatprep.subr.bf16.mxu0 0
    %1803 = vmatpush2.bf16.msra.mxu0 0
    %1804 = vmatprep.subr.bf16.mxu0 0
    %1805 = vmatpush2.bf16.msra.mxu0 0
    %1806 = vmatprep.subr.bf16.mxu0 0
    %1807 = vmatpush2.bf16.msra.mxu0 0
    %1808 = vmatprep.subr.bf16.mxu0 0
    %1809 = vmatpush2.bf16.msra.mxu0 0
    %1810 = vmatprep.subr.bf16.mxu0 0
    %1811 = vmatpush2.bf16.msra.mxu0 0
    %1812 = vmatprep.subr.bf16.mxu0 0
    %1813 = vmatpush2.bf16.msra.mxu0 0
    %1814 = vmatprep.mubr.bf16.mxu0 0
    %1815 = vmatmul.mubr.bf16.gmra.mxu0 %v1709
    %v1816 = vpop.f32.mrf.mxu0
    %v1817 = vadd.f32 0.0, %v1816
    %v1818 = vpop.f32.mrf.mxu0
    %v1819 = vpop.f32.mrf.mxu0
    %v1820 = vadd.f32 0.0, %v1819
    %v1821 = vpop.f32.mrf.mxu0
    %1822 = vmatprep.mubr.bf16.mxu0 0
    %1823 = vmatmul.mubr.bf16.gmra.mxu0 %v1710
    %v1824 = vpop.f32.mrf.mxu0
    %v1825 = vadd.f32 0.0, %v1824
    %v1826 = vpop.f32.mrf.mxu0
    %v1827 = vpop.f32.mrf.mxu0
    %v1828 = vadd.f32 0.0, %v1827
    %v1829 = vpop.f32.mrf.mxu0
    %1830 = vmatprep.mubr.bf16.mxu0 0
    %1831 = vmatmul.mubr.bf16.gmra.mxu0 %v1711
    %v1832 = vpop.f32.mrf.mxu0
    %v1833 = vadd.f32 0.0, %v1832
    %v1834 = vpop.f32.mrf.mxu0
    %v1835 = vpop.f32.mrf.mxu0
    %v1836 = vadd.f32 0.0, %v1835
    %v1837 = vpop.f32.mrf.mxu0
    %1838 = vmatprep.mubr.bf16.mxu0 0
    %1839 = vmatmul.mubr.bf16.gmra.mxu0 %v1712
    %v1840 = vpop.f32.mrf.mxu0
    %v1841 = vadd.f32 0.0, %v1840
    %v1842 = vpop.f32.mrf.mxu0
    %v1843 = vpop.f32.mrf.mxu0
    %v1844 = vadd.f32 0.0, %v1843
    %v1845 = vpop.f32.mrf.mxu0
    %1846 = vmatprep.mubr.bf16.mxu0 0
    %1847 = vmatmul.mubr.bf16.gmra.mxu0 %v1713
    %v1848 = vpop.f32.mrf.mxu0
    %v1849 = vadd.f32 0.0, %v1848
    %v1850 = vpop.f32.mrf.mxu0
    %v1851 = vpop.f32.mrf.mxu0
    %v1852 = vadd.f32 0.0, %v1851
    %v1853 = vpop.f32.mrf.mxu0
    %1854 = vmatprep.mubr.bf16.mxu0 0
    %1855 = vmatmul.mubr.bf16.gmra.mxu0 %v1714
    %v1856 = vpop.f32.mrf.mxu0
    %v1857 = vadd.f32 0.0, %v1856
    %v1858 = vpop.f32.mrf.mxu0
    %v1859 = vpop.f32.mrf.mxu0
    %v1860 = vadd.f32 0.0, %v1859
    %v1861 = vpop.f32.mrf.mxu0
    %1862 = vmatprep.mubr.bf16.mxu0 0
    %1863 = vmatmul.mubr.bf16.gmra.mxu0 %v1715
    %v1864 = vpop.f32.mrf.mxu0
    %v1865 = vadd.f32 0.0, %v1864
    %v1866 = vpop.f32.mrf.mxu0
    %v1867 = vpop.f32.mrf.mxu0
    %v1868 = vadd.f32 0.0, %v1867
    %v1869 = vpop.f32.mrf.mxu0
    %1870 = vmatprep.mubr.bf16.mxu0 0
    %1871 = vmatmul.mubr.bf16.gmra.mxu0 %v1716
    %v1872 = vpop.f32.mrf.mxu0
    %v1873 = vadd.f32 0.0, %v1872
    %v1874 = vpop.f32.mrf.mxu0
    %v1875 = vpop.f32.mrf.mxu0
    %v1876 = vadd.f32 0.0, %v1875
    %v1877 = vpop.f32.mrf.mxu0
    %1878 = vdwg.mxu0
    %v1879 = vpack.c.bf16 %v1820, %v1817
    %v1880 = vpack.c.bf16 %v1828, %v1825
    %v1881 = vpack.c.bf16 %v1836, %v1833
    %v1882 = vpack.c.bf16 %v1844, %v1841
    %v1883 = vpack.c.bf16 %v1852, %v1849
    %v1884 = vpack.c.bf16 %v1860, %v1857
    %v1885 = vpack.c.bf16 %v1868, %v1865
    %v1886 = vpack.c.bf16 %v1876, %v1873
    %s1887 = scalar_lea.vmem %s3, 5
    %v1888 = vld [vmem:[%s1887] sm:$0x1]
    %v1890 = vlaneseq
    %v1891 = vshrl.u32 %v1890, 7
    %v1892 = vsub.s32 0, %v1891
    %v1893 = vrot.slane %v1888, %v1892
    %1895 = vmatprep.subr.bf16.mxu0 0
    %1896 = vmatpush1.bf16.msra.mxu0 %v1886
    %1897 = vmatprep.subr.bf16.mxu0 0
    %1898 = vmatpush1.bf16.msra.mxu0 %v1885
    %1899 = vmatprep.subr.bf16.mxu0 0
    %1900 = vmatpush1.bf16.msra.mxu0 %v1884
    %1901 = vmatprep.subr.bf16.mxu0 0
    %1902 = vmatpush1.bf16.msra.mxu0 %v1883
    %1903 = vmatprep.subr.bf16.mxu0 0
    %1904 = vmatpush1.bf16.msra.mxu0 %v1882
    %1905 = vmatprep.subr.bf16.mxu0 0
    %1906 = vmatpush1.bf16.msra.mxu0 %v1881
    %1907 = vmatprep.subr.bf16.mxu0 0
    %1908 = vmatpush1.bf16.msra.mxu0 %v1880
    %1909 = vmatprep.subr.bf16.mxu0 0
    %1910 = vmatpush1.bf16.msra.mxu0 %v1879
    %1911 = vmatprep.subr.bf16.mxu0 0
    %1912 = vmatpush2.bf16.msra.mxu0 0
    %1913 = vmatprep.subr.bf16.mxu0 0
    %1914 = vmatpush2.bf16.msra.mxu0 0
    %1915 = vmatprep.subr.bf16.mxu0 0
    %1916 = vmatpush2.bf16.msra.mxu0 0
    %1917 = vmatprep.subr.bf16.mxu0 0
    %1918 = vmatpush2.bf16.msra.mxu0 0
    %1919 = vmatprep.subr.bf16.mxu0 0
    %1920 = vmatpush2.bf16.msra.mxu0 0
    %1921 = vmatprep.subr.bf16.mxu0 0
    %1922 = vmatpush2.bf16.msra.mxu0 0
    %1923 = vmatprep.subr.bf16.mxu0 0
    %1924 = vmatpush2.bf16.msra.mxu0 0
    %1925 = vmatprep.subr.bf16.mxu0 0
    %1926 = vmatpush2.bf16.msra.mxu0 0
    %1927 = vmatprep.mubr.bf16.mxu0 0
    %1928 = vmatmul.mubr.bf16.gmra.mxu0 %v320
    %v1929 = vpop.f32.mrf.mxu0
    %v1930 = vadd.f32 %v1893, %v1929
    %v1931 = vpop.f32.mrf.mxu0
    %v1932 = vpop.f32.mrf.mxu0
    %v1933 = vadd.f32 %v1893, %v1932
    %v1934 = vpop.f32.mrf.mxu0
    %1935 = vmatprep.mubr.bf16.mxu0 0
    %1936 = vmatmul.mubr.bf16.gmra.mxu0 %v321
    %v1937 = vpop.f32.mrf.mxu0
    %v1938 = vadd.f32 %v1893, %v1937
    %v1939 = vpop.f32.mrf.mxu0
    %v1940 = vpop.f32.mrf.mxu0
    %v1941 = vadd.f32 %v1893, %v1940
    %v1942 = vpop.f32.mrf.mxu0
    %1943 = vmatprep.mubr.bf16.mxu0 0
    %1944 = vmatmul.mubr.bf16.gmra.mxu0 %v322
    %v1945 = vpop.f32.mrf.mxu0
    %v1946 = vadd.f32 %v1893, %v1945
    %v1947 = vpop.f32.mrf.mxu0
    %v1948 = vpop.f32.mrf.mxu0
    %v1949 = vadd.f32 %v1893, %v1948
    %v1950 = vpop.f32.mrf.mxu0
    %1951 = vmatprep.mubr.bf16.mxu0 0
    %1952 = vmatmul.mubr.bf16.gmra.mxu0 %v323
    %v1953 = vpop.f32.mrf.mxu0
    %v1954 = vadd.f32 %v1893, %v1953
    %v1955 = vpop.f32.mrf.mxu0
    %v1956 = vpop.f32.mrf.mxu0
    %v1957 = vadd.f32 %v1893, %v1956
    %v1958 = vpop.f32.mrf.mxu0
    %1959 = vmatprep.mubr.bf16.mxu0 0
    %1960 = vmatmul.mubr.bf16.gmra.mxu0 %v324
    %v1961 = vpop.f32.mrf.mxu0
    %v1962 = vadd.f32 %v1893, %v1961
    %v1963 = vpop.f32.mrf.mxu0
    %v1964 = vpop.f32.mrf.mxu0
    %v1965 = vadd.f32 %v1893, %v1964
    %v1966 = vpop.f32.mrf.mxu0
    %1967 = vmatprep.mubr.bf16.mxu0 0
    %1968 = vmatmul.mubr.bf16.gmra.mxu0 %v325
    %v1969 = vpop.f32.mrf.mxu0
    %v1970 = vadd.f32 %v1893, %v1969
    %v1971 = vpop.f32.mrf.mxu0
    %v1972 = vpop.f32.mrf.mxu0
    %v1973 = vadd.f32 %v1893, %v1972
    %v1974 = vpop.f32.mrf.mxu0
    %1975 = vmatprep.mubr.bf16.mxu0 0
    %1976 = vmatmul.mubr.bf16.gmra.mxu0 %v326
    %v1977 = vpop.f32.mrf.mxu0
    %v1978 = vadd.f32 %v1893, %v1977
    %v1979 = vpop.f32.mrf.mxu0
    %v1980 = vpop.f32.mrf.mxu0
    %v1981 = vadd.f32 %v1893, %v1980
    %v1982 = vpop.f32.mrf.mxu0
    %1983 = vmatprep.mubr.bf16.mxu0 0
    %1984 = vmatmul.mubr.bf16.gmra.mxu0 %v327
    %v1985 = vpop.f32.mrf.mxu0
    %v1986 = vadd.f32 %v1893, %v1985
    %v1987 = vpop.f32.mrf.mxu0
    %v1988 = vpop.f32.mrf.mxu0
    %v1989 = vadd.f32 %v1893, %v1988
    %v1990 = vpop.f32.mrf.mxu0
    %1991 = vdwg.mxu0
    %1992 = vst [vmem:[%s4] sm:$0xff] %v1930
    %1993 = vst [vmem:[%s4 + $0x8] sm:$0xff] %v1933
    %1994 = vst [vmem:[%s4 + $0x10] sm:$0xff] %v1938
    %1995 = vst [vmem:[%s4 + $0x18] sm:$0xff] %v1941
    %1996 = vst [vmem:[%s4 + $0x20] sm:$0xff] %v1946
    %1997 = vst [vmem:[%s4 + $0x28] sm:$0xff] %v1949
    %1998 = vst [vmem:[%s4 + $0x30] sm:$0xff] %v1954
    %1999 = vst [vmem:[%s4 + $0x38] sm:$0xff] %v1957
    %2000 = vst [vmem:[%s4 + $0x40] sm:$0xff] %v1962
    %2001 = vst [vmem:[%s4 + $0x48] sm:$0xff] %v1965
    %2002 = vst [vmem:[%s4 + $0x50] sm:$0xff] %v1970
    %2003 = vst [vmem:[%s4 + $0x58] sm:$0xff] %v1973
    %2004 = vst [vmem:[%s4 + $0x60] sm:$0xff] %v1978
    %2005 = vst [vmem:[%s4 + $0x68] sm:$0xff] %v1981
    %2006 = vst [vmem:[%s4 + $0x70] sm:$0xff] %v1986
    %2007 = vst [vmem:[%s4 + $0x78] sm:$0xff] %v1989
    // Predicated region
    $region22: #{residual_gcn_forward.1} parent=1 // pred_check
      _
    $region23: #{residual_gcn_forward.1} parent=1 // pred_check_branch
      %2009 = sbr.rel (0) target = $region25
    $region24: #{residual_gcn_forward.1} parent=1 // pred_region
      _
    $region25: #{residual_gcn_forward.1} parent=1 // pred_fallthru
      _
    // Predicated region
    $region26: #{residual_gcn_forward.1} parent=1 // pred_check
      _
    $region27: #{residual_gcn_forward.1} parent=1 // pred_check_branch
      %2011 = sbr.rel (0) target = $region29
    $region28: #{residual_gcn_forward.1} parent=1 // pred_region
      _
    $region29: #{residual_gcn_forward.1} parent=1 // pred_fallthru
      _
    %2012 = vsyncpa [#allocation3], 1

</llo_original>
